<compile_context>
chip_gen: v6e
topology: v6e:2x2x1
jax: 0.10.0
libtpu: 0.0.40
codegen_flags: <defaults>
</compile_context>

<pallas_src>
import numpy as np

import jax
import jax.numpy as jnp
from jax import lax
from jax.experimental import pallas as pl
from jax.experimental.pallas import tpu as pltpu

_EPS = 1e-5


# --------------------------------------------------------------------------
# In-kernel helpers
# --------------------------------------------------------------------------
def _elu(z):
    # ELU(alpha=1); exp(min(z,0))-1 == expm1 on the clamped negative branch.
    return jnp.where(z > 0, z, jnp.exp(jnp.minimum(z, 0.0)) - 1.0)


def _zero_ring(pad_ref):
    """Zero only the 1-px border of the padded scratch; the interior is always
    fully overwritten by the caller.  Idempotent -> safe under 'parallel'."""
    hp2, wp2, c = pad_ref.shape
    pad_ref[0:1, :, :] = jnp.zeros((1, wp2, c), pad_ref.dtype)
    pad_ref[hp2 - 1:hp2, :, :] = jnp.zeros((1, wp2, c), pad_ref.dtype)
    pad_ref[:, 0:1, :] = jnp.zeros((hp2, 1, c), pad_ref.dtype)
    pad_ref[:, wp2 - 1:wp2, :] = jnp.zeros((hp2, 1, c), pad_ref.dtype)


def _conv3x3_taps(pad_ref, w_taps):
    """3x3 'same' conv as 9 per-tap MXU matmuls accumulated in f32.

    pad_ref: (Hp+2, Wp+2, Ci) VMEM scratch with the zero ring in place.
    w_taps:  (9, Ci, Co) value, tap index = 3*ky + kx.
    Returns (Hp*Wp, Co) float32.
    """
    hp = pad_ref.shape[0] - 2
    wp = pad_ref.shape[1] - 2
    ci = pad_ref.shape[2]
    co = w_taps.shape[2]
    acc = jnp.zeros((hp * wp, co), jnp.float32)
    for ky in range(3):
        for kx in range(3):
            win = pad_ref[ky:ky + hp, kx:kx + wp, :].reshape(hp * wp, ci)
            acc = acc + jnp.dot(win, w_taps[3 * ky + kx],
                                preferred_element_type=jnp.float32)
    return acc


def _partial_stats(y):
    """Per-tile BN partials: [sum, sum of squared deviations about the tile
    mean]; merged across tiles with Chan's formula in the wrapper."""
    inv_n = 1.0 / y.shape[0]
    s = jnp.sum(y, axis=0, keepdims=True)
    d = y - s * inv_n
    m2 = jnp.sum(d * d, axis=0, keepdims=True)
    return jnp.concatenate([s, m2], axis=0)          # (2, C)


# --------------------------------------------------------------------------
# Kernels
# --------------------------------------------------------------------------
def _pool_conv1_kernel(x_ref, w1_ref, y1_ref, st1_ref, pad_ref):
    cin = pad_ref.shape[2]
    hp = pad_ref.shape[0] - 2
    wp = pad_ref.shape[1] - 2
    _zero_ring(pad_ref)
    # MaxPool2d(2): the wrapper's free reshape pre-groups each 2x2 window, so
    # pooling is two in-register maxes over contiguous slices (no strides).
    t = x_ref[0]                                      # (Hp, 2, Wp, 2*Cin)
    v = jnp.maximum(t[:, 0], t[:, 1])                 # rows   -> (Hp, Wp, 2*Cin)
    pooled = jnp.maximum(v[..., :cin], v[..., cin:])  # cols   -> (Hp, Wp, Cin)
    pad_ref[1:hp + 1, 1:wp + 1, :] = pooled
    # Conv1 (3x3, pad=1, no bias), per-tap MXU accumulation in f32.
    y1 = _conv3x3_taps(pad_ref, w1_ref[...])
    y1_ref[0] = y1
    st1_ref[0] = _partial_stats(y1)


def _bn1_conv2_kernel(y1_ref, aff1_ref, w2_ref, y2_ref, st2_ref, pad_ref):
    cmid = pad_ref.shape[2]
    hp = pad_ref.shape[0] - 2
    wp = pad_ref.shape[1] - 2
    _zero_ring(pad_ref)
    # BN1 (precomputed per-channel affine) + ELU, re-padded through scratch.
    a = y1_ref[0]                                     # (Hp*Wp, Cmid) f32
    z = _elu(a * aff1_ref[0:1, :] + aff1_ref[1:2, :])
    pad_ref[1:hp + 1, 1:wp + 1, :] = (
        z.reshape(hp, wp, cmid).astype(pad_ref.dtype))
    # Conv2 (3x3, pad=1, no bias).
    y2 = _conv3x3_taps(pad_ref, w2_ref[...])
    y2_ref[0] = y2
    st2_ref[0] = _partial_stats(y2)


def _bn2_out_kernel(y2_ref, aff2_ref, o_ref):
    a = y2_ref[0]                                     # (Hp*Wp, Cout) f32
    z = _elu(a * aff2_ref[0:1, :] + aff2_ref[1:2, :])
    # Store channels-first: output is NCHW-flat, so the trailing (lane) dim is
    # Hp*Wp (lane-dense) and no wrapper-side output transpose is needed.
    o_ref[0] = z.T.astype(o_ref.dtype)


# --------------------------------------------------------------------------
# Wrapper-side glue
# --------------------------------------------------------------------------
def _bn_affine(stats, n_per_tile, gamma, beta):
    """Chan parallel-variance merge of per-tile (sum, M2) -> BN scale/shift."""
    s, m2 = stats[:, 0, :], stats[:, 1, :]
    n_total = stats.shape[0] * n_per_tile
    mean = jnp.sum(s, axis=0) / n_total
    tile_mean = s / n_per_tile
    m2_total = jnp.sum(m2, axis=0) + n_per_tile * jnp.sum(
        jnp.square(tile_mean - mean[None, :]), axis=0)
    var = jnp.maximum(m2_total / n_total, 0.0)        # biased, as in torch BN
    scale = gamma * lax.rsqrt(var + _EPS)
    shift = beta - mean * scale
    return jnp.stack([scale, shift], axis=0).astype(jnp.float32)   # (2, C)


def _vmem_limit(per_step_bytes):
    """Generation-aware scoped-VMEM request with double-buffer headroom."""
    try:
        cap = int(pltpu.get_tpu_info().vmem_capacity_bytes)
    except Exception:
        cap = 64 * 2 ** 20
    want = max(3 * int(per_step_bytes), 8 * 2 ** 20)
    return int(min(want, int(cap * 0.9)))


def down_forward(x_nchw, params, compute_dtype=jnp.bfloat16,
                 out_dtype=jnp.float32):
    """Down.forward: NCHW in, NCHW out (spatial halved, channels -> Cout).

    compute_dtype controls the matmul operand dtype (bf16 default with f32
    accumulation); BN statistics, normalization and ELU always run in f32.
    out_dtype controls the final store (bf16 halves writeback if accepted).
    """
    w1, g1, b1, w2, g2, b2 = params           # w: HWIO (3,3,Ci,Co); g/b: (C,)
    B, Cin, H, W = x_nchw.shape
    Cmid, Cout = w1.shape[-1], w2.shape[-1]
    Hp, Wp = H // 2, W // 2
    n_px = Hp * Wp
    csz = np.dtype(compute_dtype).itemsize

    # NCHW -> NHWC (+ cast) and a FREE row-major reshape that pre-groups each
    # 2x2 pooling window.  allow_input_fusion lets XLA fold this layout change
    # into the kernel operand instead of a separate HBM pass.
    x = jnp.transpose(x_nchw, (0, 2, 3, 1)).astype(compute_dtype)
    x = x.reshape(B, Hp, 2, Wp, 2 * Cin)

    w1f = w1.reshape(9, Cin, Cmid).astype(compute_dtype)    # tap = 3*ky + kx
    w2f = w2.reshape(9, Cmid, Cout).astype(compute_dtype)

    par = ("parallel",)

    # ---- Pass 1: MaxPool + Conv1 + BN1 partial statistics ------------------
    bytes_a = (2 * 4 * n_px * Cin * csz + 2 * 9 * Cin * Cmid * csz
               + 2 * n_px * Cmid * 4 + (Hp + 2) * (Wp + 2) * Cin * csz
               + n_px * (4 * Cin + 2 * Cmid) * 4)
    y1_pre, st1 = pl.pallas_call(
        _pool_conv1_kernel,
        grid=(B,),
        in_specs=[
            pl.BlockSpec((1, Hp, 2, Wp, 2 * Cin), lambda b: (b, 0, 0, 0, 0)),
            pl.BlockSpec((9, Cin, Cmid), lambda b: (0, 0, 0)),
        ],
        out_specs=(
            pl.BlockSpec((1, n_px, Cmid), lambda b: (b, 0, 0)),
            pl.BlockSpec((1, 2, Cmid), lambda b: (b, 0, 0)),
        ),
        out_shape=(
            jax.ShapeDtypeStruct((B, n_px, Cmid), jnp.float32),
            jax.ShapeDtypeStruct((B, 2, Cmid), jnp.float32),
        ),
        scratch_shapes=[pltpu.VMEM((Hp + 2, Wp + 2, Cin), compute_dtype)],
        compiler_params=pltpu.CompilerParams(
            dimension_semantics=par,
            vmem_limit_bytes=_vmem_limit(bytes_a),
            allow_input_fusion=[True, False],
        ),
    )(x, w1f)

    aff1 = _bn_affine(st1, n_px, g1.astype(jnp.float32), b1.astype(jnp.float32))

    # ---- Pass 2: BN1 + ELU + Conv2 + BN2 partial statistics ----------------
    bytes_b = (2 * n_px * Cmid * 4 + 2 * 9 * Cmid * Cout * csz
               + 2 * n_px * Cout * 4 + (Hp + 2) * (Wp + 2) * Cmid * csz
               + n_px * (2 * Cmid + 2 * Cout) * 4)
    y2_pre, st2 = pl.pallas_call(
        _bn1_conv2_kernel,
        grid=(B,),
        in_specs=[
            pl.BlockSpec((1, n_px, Cmid), lambda b: (b, 0, 0)),
            pl.BlockSpec((2, Cmid), lambda b: (0, 0)),
            pl.BlockSpec((9, Cmid, Cout), lambda b: (0, 0, 0)),
        ],
        out_specs=(
            pl.BlockSpec((1, n_px, Cout), lambda b: (b, 0, 0)),
            pl.BlockSpec((1, 2, Cout), lambda b: (b, 0, 0)),
        ),
        out_shape=(
            jax.ShapeDtypeStruct((B, n_px, Cout), jnp.float32),
            jax.ShapeDtypeStruct((B, 2, Cout), jnp.float32),
        ),
        scratch_shapes=[pltpu.VMEM((Hp + 2, Wp + 2, Cmid), compute_dtype)],
        compiler_params=pltpu.CompilerParams(
            dimension_semantics=par,
            vmem_limit_bytes=_vmem_limit(bytes_b),
        ),
    )(y1_pre, aff1, w2f)

    aff2 = _bn_affine(st2, n_px, g2.astype(jnp.float32), b2.astype(jnp.float32))

    # ---- Pass 3: BN2 + ELU, stored directly in lane-dense NCHW-flat layout --
    out_sz = np.dtype(out_dtype).itemsize
    bytes_c = 2 * n_px * Cout * (4 + out_sz) + n_px * Cout * 4
    out = pl.pallas_call(
        _bn2_out_kernel,
        grid=(B,),
        in_specs=[
            pl.BlockSpec((1, n_px, Cout), lambda b: (b, 0, 0)),
            pl.BlockSpec((2, Cout), lambda b: (0, 0)),
        ],
        out_specs=pl.BlockSpec((1, Cout, n_px), lambda b: (b, 0, 0)),
        out_shape=jax.ShapeDtypeStruct((B, Cout, n_px), out_dtype),
        compiler_params=pltpu.CompilerParams(
            dimension_semantics=par,
            vmem_limit_bytes=_vmem_limit(bytes_c),
        ),
    )(y2_pre, aff2)

    return out.reshape(B, Cout, Hp, Wp)               # free row-major reshape


# --------------------------------------------------------------------------
# Pure-JAX reference (PyTorch Down semantics, training-mode BN)
# --------------------------------------------------------------------------
def _reference(x_nchw, params, compute_dtype=jnp.bfloat16):
    w1, g1, b1, w2, g2, b2 = params
    q = lambda a: a.astype(compute_dtype)
    x = jnp.transpose(x_nchw, (0, 2, 3, 1))
    pooled = lax.reduce_window(q(x).astype(jnp.float32), -jnp.inf, lax.max,
                               (1, 2, 2, 1), (1, 2, 2, 1), 'VALID')

    def block(t, w, g, b):
        y = lax.conv_general_dilated(
            q(t), q(w), (1, 1), 'SAME',
            dimension_numbers=('NHWC', 'HWIO', 'NHWC'),
            preferred_element_type=jnp.float32,
            precision=lax.Precision.HIGHEST)
        mean = jnp.mean(y, axis=(0, 1, 2), keepdims=True)
        var = jnp.mean(jnp.square(y - mean), axis=(0, 1, 2), keepdims=True)
        yn = (y - mean) * lax.rsqrt(var + _EPS) * g.reshape(1, 1, 1, -1) \
             + b.reshape(1, 1, 1, -1)
        return jax.nn.elu(yn)

    y = block(pooled, w1, g1, b1)
    y = block(y, w2, g2, b2)
    return jnp.transpose(y, (0, 3, 1, 2))


if __name__ == "__main__":
    B, Cin, H, W = 2, 4, 16, 16
    Cout = 8          # out_channels (mid_channels defaults to out_channels)
    Cmid = Cout

    key = jax.random.PRNGKey(0)
    k = jax.random.split(key, 7)
    x = jax.random.normal(k[0], (B, Cin, H, W), jnp.float32)
    w1 = 0.2 * jax.random.normal(k[1], (3, 3, Cin, Cmid), jnp.float32)   # HWIO
    g1 = 1.0 + 0.1 * jax.random.normal(k[2], (Cmid,), jnp.float32)
    b1 = 0.1 * jax.random.normal(k[3], (Cmid,), jnp.float32)
    w2 = 0.2 * jax.random.normal(k[4], (3, 3, Cmid, Cout), jnp.float32)  # HWIO
    g2 = 1.0 + 0.1 * jax.random.normal(k[5], (Cout,), jnp.float32)
    b2 = 0.1 * jax.random.normal(k[6], (Cout,), jnp.float32)
    params = (w1, g1, b1, w2, g2, b2)

    # 1) Exact-semantics check: f32 compute mode vs. pure f32 reference.
    out32 = jax.block_until_ready(down_forward(x, params, compute_dtype=jnp.float32))
    ref32 = jax.block_until_ready(_reference(x, params, compute_dtype=jnp.float32))
    assert out32.shape == (B, Cout, H // 2, W // 2), out32.shape
    assert jnp.allclose(out32, ref32, rtol=2e-4, atol=2e-4), \
        float(jnp.max(jnp.abs(out32 - ref32)))

    # 2) Default bf16-matmul path vs. an identically-quantised reference.
    out16 = jax.block_until_ready(down_forward(x, params))
    ref16 = jax.block_until_ready(_reference(x, params))
    assert out16.shape == (B, Cout, H // 2, W // 2), out16.shape
    assert jnp.allclose(out16, ref16, rtol=1e-2, atol=1e-2), \
        float(jnp.max(jnp.abs(out16 - ref16)))

    # 3) bf16 output-dtype flag (reduced writeback) just needs to run.
    out_bf16 = jax.block_until_ready(
        down_forward(x, params, out_dtype=jnp.bfloat16))
    assert out_bf16.dtype == jnp.bfloat16

    print("KERNEL_OK")
</pallas_src>

<mosaic_0001>
module attributes {stable_mosaic.version = 11 : i64} {
  func.func @_pool_conv1_kernel(%arg0: i32, %arg1: memref<1x8x2x8x8xf32, #tpu.memory_space<vmem>>, %arg2: memref<9x4x8xf32, #tpu.memory_space<vmem>>, %arg3: memref<1x64x8xf32, #tpu.memory_space<vmem>>, %arg4: memref<1x2x8xf32, #tpu.memory_space<vmem>>, %arg5: memref<10x10x4xf32, #tpu.memory_space<vmem>>) attributes {dimension_semantics = [#tpu.dimension_semantics<parallel>], iteration_bounds = array<i64: 2>, scalar_prefetch = 0 : i64, scratch_operands = 1 : i64, tpu.core_type = #tpu.core_type<tc>, window_params = [{transform_indices = @transform_0, window_bounds = array<i64: 1, 8, 2, 8, 8>}, {pipeline_mode = #tpu.pipeline_mode<synchronous>, transform_indices = @transform_1, window_bounds = array<i64: 9, 4, 8>}, {transform_indices = @transform_2, window_bounds = array<i64: 1, 64, 8>}, {transform_indices = @transform_3, window_bounds = array<i64: 1, 2, 8>}]} {
    %cst = arith.constant 0.000000e+00 : f32
    %0 = vector.broadcast %cst : f32 to vector<1x10x4xf32>
    %c0 = arith.constant 0 : index
    %c0_0 = arith.constant 0 : index
    %c0_1 = arith.constant 0 : index
    %1 = vector.load %arg5[%c0, %c0_0, %c0_1] : memref<10x10x4xf32, #tpu.memory_space<vmem>>, vector<1x10x4xf32>
    tpu.vector_store %arg5[%c0, %c0_0, %c0_1], %0 {strides = array<i32>} : memref<10x10x4xf32, #tpu.memory_space<vmem>>, vector<1x10x4xf32>,
    %cst_2 = arith.constant 0.000000e+00 : f32
    %2 = vector.broadcast %cst_2 : f32 to vector<1x10x4xf32>
    %c9 = arith.constant 9 : index
    %c0_3 = arith.constant 0 : index
    %c0_4 = arith.constant 0 : index
    %3 = vector.load %arg5[%c9, %c0_3, %c0_4] : memref<10x10x4xf32, #tpu.memory_space<vmem>>, vector<1x10x4xf32>
    tpu.vector_store %arg5[%c9, %c0_3, %c0_4], %2 {strides = array<i32>} : memref<10x10x4xf32, #tpu.memory_space<vmem>>, vector<1x10x4xf32>,
    %cst_5 = arith.constant 0.000000e+00 : f32
    %4 = vector.broadcast %cst_5 : f32 to vector<10x1x4xf32>
    %c0_6 = arith.constant 0 : index
    %c0_7 = arith.constant 0 : index
    %c0_8 = arith.constant 0 : index
    %5 = vector.load %arg5[%c0_6, %c0_7, %c0_8] : memref<10x10x4xf32, #tpu.memory_space<vmem>>, vector<10x1x4xf32>
    tpu.vector_store %arg5[%c0_6, %c0_7, %c0_8], %4 {strides = array<i32>} : memref<10x10x4xf32, #tpu.memory_space<vmem>>, vector<10x1x4xf32>,
    %cst_9 = arith.constant 0.000000e+00 : f32
    %6 = vector.broadcast %cst_9 : f32 to vector<10x1x4xf32>
    %c0_10 = arith.constant 0 : index
    %c9_11 = arith.constant 9 : index
    %c0_12 = arith.constant 0 : index
    %7 = vector.load %arg5[%c0_10, %c9_11, %c0_12] : memref<10x10x4xf32, #tpu.memory_space<vmem>>, vector<10x1x4xf32>
    tpu.vector_store %arg5[%c0_10, %c9_11, %c0_12], %6 {strides = array<i32>} : memref<10x10x4xf32, #tpu.memory_space<vmem>>, vector<10x1x4xf32>,
    %c0_13 = arith.constant 0 : index
    %c0_14 = arith.constant 0 : index
    %c0_15 = arith.constant 0 : index
    %c0_16 = arith.constant 0 : index
    %c0_17 = arith.constant 0 : index
    %8 = vector.load %arg1[%c0_13, %c0_14, %c0_15, %c0_16, %c0_17] : memref<1x8x2x8x8xf32, #tpu.memory_space<vmem>>, vector<1x8x2x8x8xf32>
    %9 = vector.shape_cast %8 : vector<1x8x2x8x8xf32> to vector<8x2x8x8xf32>
    %10 = vector.extract_strided_slice %9 {offsets = [0, 0, 0, 0], sizes = [8, 1, 8, 8], strides = [1, 1, 1, 1]} : vector<8x2x8x8xf32> to vector<8x1x8x8xf32>
    %11 = vector.shape_cast %10 : vector<8x1x8x8xf32> to vector<8x8x8xf32>
    %12 = vector.extract_strided_slice %9 {offsets = [0, 1, 0, 0], sizes = [8, 1, 8, 8], strides = [1, 1, 1, 1]} : vector<8x2x8x8xf32> to vector<8x1x8x8xf32>
    %13 = vector.shape_cast %12 : vector<8x1x8x8xf32> to vector<8x8x8xf32>
    %14 = arith.maximumf %11, %13 : vector<8x8x8xf32>
    %15 = vector.extract_strided_slice %14 {offsets = [0, 0, 0], sizes = [8, 8, 4], strides = [1, 1, 1]} : vector<8x8x8xf32> to vector<8x8x4xf32>
    %16 = vector.extract_strided_slice %14 {offsets = [0, 0, 4], sizes = [8, 8, 4], strides = [1, 1, 1]} : vector<8x8x8xf32> to vector<8x8x4xf32>
    %17 = arith.maximumf %15, %16 : vector<8x8x4xf32>
    %c1 = arith.constant 1 : index
    %c1_18 = arith.constant 1 : index
    %c0_19 = arith.constant 0 : index
    %18 = vector.load %arg5[%c1, %c1_18, %c0_19] : memref<10x10x4xf32, #tpu.memory_space<vmem>>, vector<8x8x4xf32>
    tpu.vector_store %arg5[%c1, %c1_18, %c0_19], %17 {strides = array<i32>} : memref<10x10x4xf32, #tpu.memory_space<vmem>>, vector<8x8x4xf32>,
    %c0_20 = arith.constant 0 : index
    %c0_21 = arith.constant 0 : index
    %c0_22 = arith.constant 0 : index
    %19 = vector.load %arg2[%c0_20, %c0_21, %c0_22] : memref<9x4x8xf32, #tpu.memory_space<vmem>>, vector<9x4x8xf32>
    %cst_23 = arith.constant 0.000000e+00 : f32
    %20 = vector.broadcast %cst_23 : f32 to vector<64x8xf32>
    %c0_24 = arith.constant 0 : index
    %c0_25 = arith.constant 0 : index
    %c0_26 = arith.constant 0 : index
    %21 = vector.load %arg5[%c0_24, %c0_25, %c0_26] : memref<10x10x4xf32, #tpu.memory_space<vmem>>, vector<8x8x4xf32>
    %22 = vector.shape_cast %21 : vector<8x8x4xf32> to vector<64x4xf32>
    %23 = vector.extract_strided_slice %19 {offsets = [0, 0, 0], sizes = [1, 4, 8], strides = [1, 1, 1]} : vector<9x4x8xf32> to vector<1x4x8xf32>
    %24 = vector.shape_cast %23 : vector<1x4x8xf32> to vector<4x8xf32>
    %cst_27 = arith.constant dense<0.000000e+00> : vector<64x8xf32>
    %25 = tpu.matmul %22, %24, %cst_27 {dimension_numbers = #tpu.dot_dimension_numbers<[1], [0], [0], [1], [0, 0, 1, 1], [], []>} : vector<64x4xf32>, vector<4x8xf32>, vector<64x8xf32> -> vector<64x8xf32>
    %26 = arith.addf %20, %25 : vector<64x8xf32>
    %c0_28 = arith.constant 0 : index
    %c1_29 = arith.constant 1 : index
    %c0_30 = arith.constant 0 : index
    %27 = vector.load %arg5[%c0_28, %c1_29, %c0_30] : memref<10x10x4xf32, #tpu.memory_space<vmem>>, vector<8x8x4xf32>
    %28 = vector.shape_cast %27 : vector<8x8x4xf32> to vector<64x4xf32>
    %29 = vector.extract_strided_slice %19 {offsets = [1, 0, 0], sizes = [1, 4, 8], strides = [1, 1, 1]} : vector<9x4x8xf32> to vector<1x4x8xf32>
    %30 = vector.shape_cast %29 : vector<1x4x8xf32> to vector<4x8xf32>
    %cst_31 = arith.constant dense<0.000000e+00> : vector<64x8xf32>
    %31 = tpu.matmul %28, %30, %cst_31 {dimension_numbers = #tpu.dot_dimension_numbers<[1], [0], [0], [1], [0, 0, 1, 1], [], []>} : vector<64x4xf32>, vector<4x8xf32>, vector<64x8xf32> -> vector<64x8xf32>
    %32 = arith.addf %26, %31 : vector<64x8xf32>
    %c0_32 = arith.constant 0 : index
    %c2 = arith.constant 2 : index
    %c0_33 = arith.constant 0 : index
    %33 = vector.load %arg5[%c0_32, %c2, %c0_33] : memref<10x10x4xf32, #tpu.memory_space<vmem>>, vector<8x8x4xf32>
    %34 = vector.shape_cast %33 : vector<8x8x4xf32> to vector<64x4xf32>
    %35 = vector.extract_strided_slice %19 {offsets = [2, 0, 0], sizes = [1, 4, 8], strides = [1, 1, 1]} : vector<9x4x8xf32> to vector<1x4x8xf32>
    %36 = vector.shape_cast %35 : vector<1x4x8xf32> to vector<4x8xf32>
    %cst_34 = arith.constant dense<0.000000e+00> : vector<64x8xf32>
    %37 = tpu.matmul %34, %36, %cst_34 {dimension_numbers = #tpu.dot_dimension_numbers<[1], [0], [0], [1], [0, 0, 1, 1], [], []>} : vector<64x4xf32>, vector<4x8xf32>, vector<64x8xf32> -> vector<64x8xf32>
    %38 = arith.addf %32, %37 : vector<64x8xf32>
    %c1_35 = arith.constant 1 : index
    %c0_36 = arith.constant 0 : index
    %c0_37 = arith.constant 0 : index
    %39 = vector.load %arg5[%c1_35, %c0_36, %c0_37] : memref<10x10x4xf32, #tpu.memory_space<vmem>>, vector<8x8x4xf32>
    %40 = vector.shape_cast %39 : vector<8x8x4xf32> to vector<64x4xf32>
    %41 = vector.extract_strided_slice %19 {offsets = [3, 0, 0], sizes = [1, 4, 8], strides = [1, 1, 1]} : vector<9x4x8xf32> to vector<1x4x8xf32>
    %42 = vector.shape_cast %41 : vector<1x4x8xf32> to vector<4x8xf32>
    %cst_38 = arith.constant dense<0.000000e+00> : vector<64x8xf32>
    %43 = tpu.matmul %40, %42, %cst_38 {dimension_numbers = #tpu.dot_dimension_numbers<[1], [0], [0], [1], [0, 0, 1, 1], [], []>} : vector<64x4xf32>, vector<4x8xf32>, vector<64x8xf32> -> vector<64x8xf32>
    %44 = arith.addf %38, %43 : vector<64x8xf32>
    %c1_39 = arith.constant 1 : index
    %c1_40 = arith.constant 1 : index
    %c0_41 = arith.constant 0 : index
    %45 = vector.load %arg5[%c1_39, %c1_40, %c0_41] : memref<10x10x4xf32, #tpu.memory_space<vmem>>, vector<8x8x4xf32>
    %46 = vector.shape_cast %45 : vector<8x8x4xf32> to vector<64x4xf32>
    %47 = vector.extract_strided_slice %19 {offsets = [4, 0, 0], sizes = [1, 4, 8], strides = [1, 1, 1]} : vector<9x4x8xf32> to vector<1x4x8xf32>
    %48 = vector.shape_cast %47 : vector<1x4x8xf32> to vector<4x8xf32>
    %cst_42 = arith.constant dense<0.000000e+00> : vector<64x8xf32>
    %49 = tpu.matmul %46, %48, %cst_42 {dimension_numbers = #tpu.dot_dimension_numbers<[1], [0], [0], [1], [0, 0, 1, 1], [], []>} : vector<64x4xf32>, vector<4x8xf32>, vector<64x8xf32> -> vector<64x8xf32>
    %50 = arith.addf %44, %49 : vector<64x8xf32>
    %c1_43 = arith.constant 1 : index
    %c2_44 = arith.constant 2 : index
    %c0_45 = arith.constant 0 : index
    %51 = vector.load %arg5[%c1_43, %c2_44, %c0_45] : memref<10x10x4xf32, #tpu.memory_space<vmem>>, vector<8x8x4xf32>
    %52 = vector.shape_cast %51 : vector<8x8x4xf32> to vector<64x4xf32>
    %53 = vector.extract_strided_slice %19 {offsets = [5, 0, 0], sizes = [1, 4, 8], strides = [1, 1, 1]} : vector<9x4x8xf32> to vector<1x4x8xf32>
    %54 = vector.shape_cast %53 : vector<1x4x8xf32> to vector<4x8xf32>
    %cst_46 = arith.constant dense<0.000000e+00> : vector<64x8xf32>
    %55 = tpu.matmul %52, %54, %cst_46 {dimension_numbers = #tpu.dot_dimension_numbers<[1], [0], [0], [1], [0, 0, 1, 1], [], []>} : vector<64x4xf32>, vector<4x8xf32>, vector<64x8xf32> -> vector<64x8xf32>
    %56 = arith.addf %50, %55 : vector<64x8xf32>
    %c2_47 = arith.constant 2 : index
    %c0_48 = arith.constant 0 : index
    %c0_49 = arith.constant 0 : index
    %57 = vector.load %arg5[%c2_47, %c0_48, %c0_49] : memref<10x10x4xf32, #tpu.memory_space<vmem>>, vector<8x8x4xf32>
    %58 = vector.shape_cast %57 : vector<8x8x4xf32> to vector<64x4xf32>
    %59 = vector.extract_strided_slice %19 {offsets = [6, 0, 0], sizes = [1, 4, 8], strides = [1, 1, 1]} : vector<9x4x8xf32> to vector<1x4x8xf32>
    %60 = vector.shape_cast %59 : vector<1x4x8xf32> to vector<4x8xf32>
    %cst_50 = arith.constant dense<0.000000e+00> : vector<64x8xf32>
    %61 = tpu.matmul %58, %60, %cst_50 {dimension_numbers = #tpu.dot_dimension_numbers<[1], [0], [0], [1], [0, 0, 1, 1], [], []>} : vector<64x4xf32>, vector<4x8xf32>, vector<64x8xf32> -> vector<64x8xf32>
    %62 = arith.addf %56, %61 : vector<64x8xf32>
    %c2_51 = arith.constant 2 : index
    %c1_52 = arith.constant 1 : index
    %c0_53 = arith.constant 0 : index
    %63 = vector.load %arg5[%c2_51, %c1_52, %c0_53] : memref<10x10x4xf32, #tpu.memory_space<vmem>>, vector<8x8x4xf32>
    %64 = vector.shape_cast %63 : vector<8x8x4xf32> to vector<64x4xf32>
    %65 = vector.extract_strided_slice %19 {offsets = [7, 0, 0], sizes = [1, 4, 8], strides = [1, 1, 1]} : vector<9x4x8xf32> to vector<1x4x8xf32>
    %66 = vector.shape_cast %65 : vector<1x4x8xf32> to vector<4x8xf32>
    %cst_54 = arith.constant dense<0.000000e+00> : vector<64x8xf32>
    %67 = tpu.matmul %64, %66, %cst_54 {dimension_numbers = #tpu.dot_dimension_numbers<[1], [0], [0], [1], [0, 0, 1, 1], [], []>} : vector<64x4xf32>, vector<4x8xf32>, vector<64x8xf32> -> vector<64x8xf32>
    %68 = arith.addf %62, %67 : vector<64x8xf32>
    %c2_55 = arith.constant 2 : index
    %c2_56 = arith.constant 2 : index
    %c0_57 = arith.constant 0 : index
    %69 = vector.load %arg5[%c2_55, %c2_56, %c0_57] : memref<10x10x4xf32, #tpu.memory_space<vmem>>, vector<8x8x4xf32>
    %70 = vector.shape_cast %69 : vector<8x8x4xf32> to vector<64x4xf32>
    %71 = vector.extract_strided_slice %19 {offsets = [8, 0, 0], sizes = [1, 4, 8], strides = [1, 1, 1]} : vector<9x4x8xf32> to vector<1x4x8xf32>
    %72 = vector.shape_cast %71 : vector<1x4x8xf32> to vector<4x8xf32>
    %cst_58 = arith.constant dense<0.000000e+00> : vector<64x8xf32>
    %73 = tpu.matmul %70, %72, %cst_58 {dimension_numbers = #tpu.dot_dimension_numbers<[1], [0], [0], [1], [0, 0, 1, 1], [], []>} : vector<64x4xf32>, vector<4x8xf32>, vector<64x8xf32> -> vector<64x8xf32>
    %74 = arith.addf %68, %73 : vector<64x8xf32>
    %c0_59 = arith.constant 0 : index
    %c0_60 = arith.constant 0 : index
    %c0_61 = arith.constant 0 : index
    %75 = vector.load %arg3[%c0_59, %c0_60, %c0_61] : memref<1x64x8xf32, #tpu.memory_space<vmem>>, vector<1x64x8xf32>
    %76 = vector.shape_cast %75 : vector<1x64x8xf32> to vector<64x8xf32>
    %77 = vector.shape_cast %74 : vector<64x8xf32> to vector<1x64x8xf32>
    tpu.vector_store %arg3[%c0_59, %c0_60, %c0_61], %77 {strides = array<i32>} : memref<1x64x8xf32, #tpu.memory_space<vmem>>, vector<1x64x8xf32>,
    %cst_62 = arith.constant dense<0.000000e+00> : vector<8xf32>
    %78 = vector.multi_reduction <add>, %74, %cst_62 [0] : vector<64x8xf32> to vector<8xf32>
    %79 = vector.shape_cast %78 : vector<8xf32> to vector<1x8xf32>
    %cst_63 = arith.constant 1.562500e-02 : f32
    %80 = vector.broadcast %cst_63 : f32 to vector<1x8xf32>
    %81 = arith.mulf %79, %80 : vector<1x8xf32>
    %82 = vector.broadcast %81 : vector<1x8xf32> to vector<64x8xf32>
    %83 = arith.subf %74, %82 : vector<64x8xf32>
    %84 = arith.mulf %83, %83 : vector<64x8xf32>
    %cst_64 = arith.constant dense<0.000000e+00> : vector<8xf32>
    %85 = vector.multi_reduction <add>, %84, %cst_64 [0] : vector<64x8xf32> to vector<8xf32>
    %86 = vector.shape_cast %85 : vector<8xf32> to vector<1x8xf32>
    %87 = tpu.concatenate %79, %86 in 0 : vector<1x8xf32>, vector<1x8xf32> -> vector<2x8xf32>
    %c0_65 = arith.constant 0 : index
    %c0_66 = arith.constant 0 : index
    %c0_67 = arith.constant 0 : index
    %88 = vector.load %arg4[%c0_65, %c0_66, %c0_67] : memref<1x2x8xf32, #tpu.memory_space<vmem>>, vector<1x2x8xf32>
    %89 = vector.shape_cast %88 : vector<1x2x8xf32> to vector<2x8xf32>
    %90 = vector.shape_cast %87 : vector<2x8xf32> to vector<1x2x8xf32>
    tpu.vector_store %arg4[%c0_65, %c0_66, %c0_67], %90 {strides = array<i32>} : memref<1x2x8xf32, #tpu.memory_space<vmem>>, vector<1x2x8xf32>,
    return
  }
  func.func @transform_0(%arg0: i32) -> (i32, i32, i32, i32, i32) {
    %c0_i32 = arith.constant 0 : i32
    %c0_i32_0 = arith.constant 0 : i32
    %c0_i32_1 = arith.constant 0 : i32
    %c0_i32_2 = arith.constant 0 : i32
    %c0_i32_3 = arith.constant 0 : i32
    return %arg0, %c0_i32, %c0_i32_0, %c0_i32_1, %c0_i32_2 : i32, i32, i32, i32, i32
  }
  func.func @transform_1(%arg0: i32) -> (i32, i32, i32) {
    %c0_i32 = arith.constant 0 : i32
    %c0_i32_0 = arith.constant 0 : i32
    %c0_i32_1 = arith.constant 0 : i32
    %c0_i32_2 = arith.constant 0 : i32
    return %c0_i32, %c0_i32_0, %c0_i32_1 : i32, i32, i32
  }
  func.func @transform_2(%arg0: i32) -> (i32, i32, i32) {
    %c0_i32 = arith.constant 0 : i32
    %c0_i32_0 = arith.constant 0 : i32
    %c0_i32_1 = arith.constant 0 : i32
    return %arg0, %c0_i32, %c0_i32_0 : i32, i32, i32
  }
  func.func @transform_3(%arg0: i32) -> (i32, i32, i32) {
    %c0_i32 = arith.constant 0 : i32
    %c0_i32_0 = arith.constant 0 : i32
    %c0_i32_1 = arith.constant 0 : i32
    return %arg0, %c0_i32, %c0_i32_0 : i32, i32, i32
  }
}

</mosaic_0001>

<llo_original>
// kernel: tpu_custom_call.1
$region0: #{tpu_custom_call.1}
  #allocation0 [shape = 'u32[]', space=smem, size = 0x4, offset = 0x4, fixed_abs, tag = 'smem constant byte address 0x4 - core index']
  #allocation1 [shape = 'u32[144,128]{1,0:T(1,128)}', space=vmem, size = 0x12000, scoped, tag = 'internal scratch']
  #allocation2 [shape = 'f32[10,10,4]{2,1,0:T(8,128)}', space=vmem, size = 0x14000, scoped, tag = 'scratch operand']
  %s0 = inlined_call_operand.hbm [shape: f32[2,8,2,8,8], index: 0, kind: input, shape index: {}]
  %s1 = inlined_call_operand.vmem [shape: f32[9,4,8], index: 1, kind: input, shape index: {}]
  %s2 = inlined_call_operand.vmem [shape: f32[2,64,8], index: 2, kind: output, shape index: {0}]
  %s3 = inlined_call_operand.hbm [shape: f32[2,2,8], index: 3, kind: output, shape index: {1}]
  %4 = xla_tuple %s2, %s3
  %s5 = sld [smem:[#allocation0]]
  $region53: #{tpu_custom_call.1} parent=0
    _
  %s7 = ssub.s32 1, %s5
  %s8 = scalar_select 0, %s7, %s5
  $region1: #{tpu_custom_call.1} parent=0
    #allocation3 [shape = 'u8[131072]{0}', space=vmem, size = 0x20000, scoped, tag = 'input window, operand 0']
    #allocation4 [shape = 's32[2]{0}', space=sflag, size = 0x8, scoped, tag = 'scoped memory for tpu_custom_call.1']
    #allocation5 [shape = 's32[2]{0}', space=sflag, size = 0x8, scoped, tag = 'scoped memory for tpu_custom_call.1']
    #allocation6 [shape = 'u8[2048]{0}', space=vmem, size = 0x800, scoped, tag = 'output window, operand 1']
    %9 = vsyncpa [#allocation4], 0
    %s10 = scalar_lea.sflag [#allocation4], 1
    %11 = vsyncpa %s10, 0
    %12 = vsyncpa [#allocation5], 0
    %s13 = scalar_lea.sflag [#allocation5], 1
    %14 = vsyncpa %s13, 0
    loop: start=0, step=1, limit=4
    $region2: #{tpu_custom_call.1} parent=1 // loop_pre_header
      _
    $region3: #{tpu_custom_call.1} parent=1 // loop_header
      %s16 = sphi 0, %s20
      %p17 = scmp.ge.s32.totalorder %s16, 4
      %s26 = sphi 0, %s28
      %s29 = sphi 0, %s26
      %s30 = sphi 0, %s29
      %s46 = sphi 0, %s30
      %s50 = sphi 0, %s50
      %s52 = sphi 0, %s50
      %s53 = sphi 0, %s52
      %s67 = sphi 0, %s53
      %s73 = sphi 0, %s75
      %s76 = sphi 0, %s73
      %s77 = sphi 0, %s76
      %s93 = sphi 0, %s77
      %s99 = sphi 0, %s101
      %s102 = sphi 0, %s99
      %s103 = sphi 0, %s102
      %s119 = sphi 0, %s103
    $region4: #{tpu_custom_call.1} parent=1 // loop_header_branch
      %19 = sbr.rel (%p17) target = $region8
    $region5: #{tpu_custom_call.1} parent=1 // loop_body
      %s21 = ssub.s32 %s16, 1
      %s22 = ssub.s32 %s16, 2
      %s23 = sadd.s32 %s16, 1
      %s24 = ssub.s32 %s16, %s23
      %p25 = scmp.eq.s32.totalorder %s24, 0
      %s27 = sadd.s32 %s26, 1
      %s28 = scalar_select %p25, %s26, %s27
      %p31 = pneg %p25
      %p32 = scmp.eq.s32.totalorder %s16, 1
      %p33 = por %p31, %p32
      %p34 = scmp.ne.s32.totalorder %s26, %s29
      %p35 = scmp.eq.s32.totalorder %s16, 0
      %p36 = por %p34, %p35
      %p37 = scmp.ne.s32.totalorder %s26, %s29
      %p38 = scmp.eq.s32.totalorder %s21, 1
      %p39 = por %p37, %p38
      %p40 = scmp.ne.s32.totalorder %s29, %s30
      %p41 = scmp.eq.s32.totalorder %s21, 0
      %p42 = por %p40, %p41
      %p43 = scmp.ne.s32.totalorder %s29, %s30
      %p44 = scmp.eq.s32.totalorder %s22, 1
      %p45 = por %p43, %p44
      %p47 = scmp.ne.s32.totalorder %s30, %s46
      %p48 = scmp.eq.s32.totalorder %s22, 0
      %p49 = por %p47, %p48
      %s51 = sadd.s32 %s50, 1
      %p54 = scmp.eq.s32.totalorder %s16, 1
      %p55 = scmp.ne.s32.totalorder %s50, %s52
      %p56 = scmp.eq.s32.totalorder %s16, 0
      %p57 = por %p55, %p56
      %p58 = scmp.ne.s32.totalorder %s50, %s52
      %p59 = scmp.eq.s32.totalorder %s21, 1
      %p60 = por %p58, %p59
      %p61 = scmp.ne.s32.totalorder %s52, %s53
      %p62 = scmp.eq.s32.totalorder %s21, 0
      %p63 = por %p61, %p62
      %p64 = scmp.ne.s32.totalorder %s52, %s53
      %p65 = scmp.eq.s32.totalorder %s22, 1
      %p66 = por %p64, %p65
      %p68 = scmp.ne.s32.totalorder %s53, %s67
      %p69 = scmp.eq.s32.totalorder %s22, 0
      %p70 = por %p68, %p69
      %s71 = ssub.s32 %s16, %s23
      %p72 = scmp.eq.s32.totalorder %s71, 0
      %s74 = sadd.s32 %s73, 1
      %s75 = scalar_select %p72, %s73, %s74
      %p78 = pneg %p72
      %p79 = scmp.eq.s32.totalorder %s16, 1
      %p80 = por %p78, %p79
      %p81 = scmp.ne.s32.totalorder %s73, %s76
      %p82 = scmp.eq.s32.totalorder %s16, 0
      %p83 = por %p81, %p82
      %p84 = scmp.ne.s32.totalorder %s73, %s76
      %p85 = scmp.eq.s32.totalorder %s21, 1
      %p86 = por %p84, %p85
      %p87 = scmp.ne.s32.totalorder %s76, %s77
      %p88 = scmp.eq.s32.totalorder %s21, 0
      %p89 = por %p87, %p88
      %p90 = scmp.ne.s32.totalorder %s76, %s77
      %p91 = scmp.eq.s32.totalorder %s22, 1
      %p92 = por %p90, %p91
      %p94 = scmp.ne.s32.totalorder %s77, %s93
      %p95 = scmp.eq.s32.totalorder %s22, 0
      %p96 = por %p94, %p95
      %s97 = ssub.s32 %s16, %s23
      %p98 = scmp.eq.s32.totalorder %s97, 0
      %s100 = sadd.s32 %s99, 1
      %s101 = scalar_select %p98, %s99, %s100
      %p104 = pneg %p98
      %p105 = scmp.eq.s32.totalorder %s16, 1
      %p106 = por %p104, %p105
      %p107 = scmp.ne.s32.totalorder %s99, %s102
      %p108 = scmp.eq.s32.totalorder %s16, 0
      %p109 = por %p107, %p108
      %p110 = scmp.ne.s32.totalorder %s99, %s102
      %p111 = scmp.eq.s32.totalorder %s21, 1
      %p112 = por %p110, %p111
      %p113 = scmp.ne.s32.totalorder %s102, %s103
      %p114 = scmp.eq.s32.totalorder %s21, 0
      %p115 = por %p113, %p114
      %p116 = scmp.ne.s32.totalorder %s102, %s103
      %p117 = scmp.eq.s32.totalorder %s22, 1
      %p118 = por %p116, %p117
      %p120 = scmp.ne.s32.totalorder %s103, %s119
      %p121 = scmp.eq.s32.totalorder %s22, 0
      %p122 = por %p120, %p121
      %p123 = scmp.le.s32.totalorder 1, %s16
      %p124 = scmp.lt.s32.totalorder %s16, 3
      %p125 = pnand %p123, %p124
      %p126 = pneg %p125
      // Predicated region
      $region9: #{tpu_custom_call.1} parent=5 // pred_check
        _
      $region10: #{tpu_custom_call.1} parent=5 // pred_check_branch
        %128 = sbr.rel (%p125) target = $region12
      $region11: #{tpu_custom_call.1} parent=5 // pred_region
        %s129 = ssub.s32 %s16, 1
        // Predicated region
        $region13: #{tpu_custom_call.1} parent=11 // pred_check
          %p130 = pneg %p63
        $region14: #{tpu_custom_call.1} parent=11 // pred_check_branch
          %132 = sbr.rel (%p130) target = $region16
        $region15: #{tpu_custom_call.1} parent=11 // pred_region
          _
        $region16: #{tpu_custom_call.1} parent=11 // pred_fallthru
          _
      $region12: #{tpu_custom_call.1} parent=5 // pred_fallthru
        _
      %p133 = scmp.lt.s32.totalorder %s16, 2
      // Predicated region
      $region17: #{tpu_custom_call.1} parent=5 // pred_check
        %p134 = pneg %p133
      $region18: #{tpu_custom_call.1} parent=5 // pred_check_branch
        %136 = sbr.rel (%p134) target = $region20
      $region19: #{tpu_custom_call.1} parent=5 // pred_region
        // Predicated region
        $region21: #{tpu_custom_call.1} parent=19 // pred_check
          %p137 = pneg %p36
        $region22: #{tpu_custom_call.1} parent=19 // pred_check_branch
          %139 = sbr.rel (%p137) target = $region24
        $region23: #{tpu_custom_call.1} parent=19 // pred_region
          %s140 = sand.u32 %s26, 1
          %s141 = scalar_lea.sflag [#allocation4], %s140
          %s142 = sand.u32 %s26, 1
          %s143 = smul.addr %s142, 128
          %s144 = scalar_lea.vmem [#allocation3], %s143
          %s146 = ssub.s32 2048, 2048
          %147 = vsyncadd %s141, %s146
          %s148 = smul.addr %s16, 16
          %s149 = smul.addr %s148, 128
          %s150 = scalar_lea.hbm %s0, %s149
          %s151 = sshll.u32 %s144, 4
          %s152 = int_to_ptr.vmem [resolvable:$true] %s151
          %157 = dma.hbm_to_vmem [thread:$0]  %s150, 2048, %s152, %s141, 128, 128, 8
        $region24: #{tpu_custom_call.1} parent=19 // pred_fallthru
          _
      $region20: #{tpu_custom_call.1} parent=5 // pred_fallthru
        _
      %p158 = scmp.le.s32.totalorder 1, %s16
      %p159 = scmp.lt.s32.totalorder %s16, 3
      %p160 = pnand %p158, %p159
      %p161 = pneg %p160
      // Predicated region
      $region25: #{tpu_custom_call.1} parent=5 // pred_check
        _
      $region26: #{tpu_custom_call.1} parent=5 // pred_check_branch
        %163 = sbr.rel (%p160) target = $region28
      $region27: #{tpu_custom_call.1} parent=5 // pred_region
        %s164 = ssub.s32 %s16, 1
        %s165 = sand.u32 %s29, 1
        %s166 = scalar_lea.sflag [#allocation4], %s165
        %s167 = sand.u32 %s29, 1
        %s168 = smul.addr %s167, 128
        %s169 = scalar_lea.vmem [#allocation3], %s168
        // Predicated region
        $region29: #{tpu_custom_call.1} parent=27 // pred_check
          %p170 = pneg %p42
        $region30: #{tpu_custom_call.1} parent=27 // pred_check_branch
          %172 = sbr.rel (%p170) target = $region32
        $region31: #{tpu_custom_call.1} parent=27 // pred_region
          %173 = dma.done %s166, 2048
        $region32: #{tpu_custom_call.1} parent=27 // pred_fallthru
          _
        %s174 = sand.u32 %s29, 1
        %s175 = scalar_lea.sflag [#allocation4], %s174
        %s176 = sand.u32 %s29, 1
        %s177 = smul.addr %s176, 128
        %s178 = scalar_lea.vmem [#allocation3], %s177
        %p179 = pneg %p42
        %p180 = pneg %p39
        %p181 = pneg %p63
        %p182 = pneg %p60
        %p183 = pneg %p89
        %p184 = pneg %p86
        %p185 = scmp.lt.s32.totalorder %s21, 1
        %s186 = scalar_select %p185, %s21, 1
        %s187 = smul.addr %s186, 8
        %s188 = smul.addr %s187, 8
        %s189 = scalar_lea.vmem %s2, %s188
        %p190 = pneg %p115
        %p191 = pneg %p112
        %s192 = sand.u32 %s102, 1
        %s193 = scalar_lea.sflag [#allocation5], %s192
        %s194 = sand.u32 %s102, 1
        %s195 = smul.addr %s194, 2
        %s196 = scalar_lea.vmem [#allocation6], %s195
        %p197 = scmp.lt.s32.totalorder %s21, 1
        %s198 = scalar_select %p197, %s21, 1
        %s199 = smul.addr %s198, 8
        %s200 = smul.addr %s199, 8
        %s201 = scalar_lea.vmem %s2, %s200
        %vm202 = vcmask 31744
        %203 = vst.msk [vmem:[#allocation2] sm:$0xff] %vm202, 0.0
        %vm204 = vcmask 25600
        %205 = vst.msk [vmem:[#allocation2 + $0x8] sm:$0x3] %vm204, 0.0
        %s206 = scalar_lea.vmem [#allocation2], 144
        %207 = vst.msk [vmem:[%s206] sm:$0xff] %vm202, 0.0
        %208 = vst.msk [vmem:[%s206 + $0x8] sm:$0x3] %vm204, 0.0
        %vm209 = vcmask 24576
        %210 = vst.msk [vmem:[#allocation2] sm:$0x1] %vm209, 0.0
        %211 = vst.msk [vmem:[#allocation2 + $0x10] sm:$0x1] %vm209, 0.0
        %212 = vst.msk [vmem:[#allocation2 + $0x20] sm:$0x1] %vm209, 0.0
        %213 = vst.msk [vmem:[#allocation2 + $0x30] sm:$0x1] %vm209, 0.0
        %214 = vst.msk [vmem:[#allocation2 + $0x40] sm:$0x1] %vm209, 0.0
        %215 = vst.msk [vmem:[#allocation2 + $0x50] sm:$0x1] %vm209, 0.0
        %216 = vst.msk [vmem:[#allocation2 + $0x60] sm:$0x1] %vm209, 0.0
        %217 = vst.msk [vmem:[#allocation2 + $0x70] sm:$0x1] %vm209, 0.0
        %218 = vst.msk [vmem:[#allocation2 + $0x80] sm:$0x1] %vm209, 0.0
        %219 = vst.msk [vmem:[#allocation2 + $0x90] sm:$0x1] %vm209, 0.0
        %220 = vst.msk [vmem:[#allocation2 + $0x9] sm:$0x1] %vm209, 0.0
        %221 = vst.msk [vmem:[#allocation2 + $0x19] sm:$0x1] %vm209, 0.0
        %222 = vst.msk [vmem:[#allocation2 + $0x29] sm:$0x1] %vm209, 0.0
        %223 = vst.msk [vmem:[#allocation2 + $0x39] sm:$0x1] %vm209, 0.0
        %224 = vst.msk [vmem:[#allocation2 + $0x49] sm:$0x1] %vm209, 0.0
        %225 = vst.msk [vmem:[#allocation2 + $0x59] sm:$0x1] %vm209, 0.0
        %226 = vst.msk [vmem:[#allocation2 + $0x69] sm:$0x1] %vm209, 0.0
        %227 = vst.msk [vmem:[#allocation2 + $0x79] sm:$0x1] %vm209, 0.0
        %228 = vst.msk [vmem:[#allocation2 + $0x89] sm:$0x1] %vm209, 0.0
        %229 = vst.msk [vmem:[#allocation2 + $0x99] sm:$0x1] %vm209, 0.0
        %v230 = vld [vmem:[%s169] sm:$0xff]
        %v231 = vld [vmem:[%s169 + $0x8] sm:$0xff]
        %v232 = vld [vmem:[%s169 + $0x10] sm:$0xff]
        %v233 = vld [vmem:[%s169 + $0x18] sm:$0xff]
        %v234 = vld [vmem:[%s169 + $0x20] sm:$0xff]
        %v235 = vld [vmem:[%s169 + $0x28] sm:$0xff]
        %v236 = vld [vmem:[%s169 + $0x30] sm:$0xff]
        %v237 = vld [vmem:[%s169 + $0x38] sm:$0xff]
        %v238 = vld [vmem:[%s169 + $0x40] sm:$0xff]
        %v239 = vld [vmem:[%s169 + $0x48] sm:$0xff]
        %v240 = vld [vmem:[%s169 + $0x50] sm:$0xff]
        %v241 = vld [vmem:[%s169 + $0x58] sm:$0xff]
        %v242 = vld [vmem:[%s169 + $0x60] sm:$0xff]
        %v243 = vld [vmem:[%s169 + $0x68] sm:$0xff]
        %v244 = vld [vmem:[%s169 + $0x70] sm:$0xff]
        %v245 = vld [vmem:[%s169 + $0x78] sm:$0xff]
        %v246 = vmax.f32 %v230, %v231
        %v247 = vmax.f32 %v232, %v233
        %v248 = vmax.f32 %v234, %v235
        %v249 = vmax.f32 %v236, %v237
        %v250 = vmax.f32 %v238, %v239
        %v251 = vmax.f32 %v240, %v241
        %v252 = vmax.f32 %v242, %v243
        %v253 = vmax.f32 %v244, %v245
        %262 = vrot.lane.b32.xlu0 %v246, 124
        %v263 = vpop.permute.xlu0 %262
        %264 = vrot.lane.b32.xlu0 %v247, 124
        %v265 = vpop.permute.xlu0 %264
        %266 = vrot.lane.b32.xlu0 %v248, 124
        %v267 = vpop.permute.xlu0 %266
        %268 = vrot.lane.b32.xlu0 %v249, 124
        %v269 = vpop.permute.xlu0 %268
        %270 = vrot.lane.b32.xlu0 %v250, 124
        %v271 = vpop.permute.xlu0 %270
        %272 = vrot.lane.b32.xlu0 %v251, 124
        %v273 = vpop.permute.xlu0 %272
        %274 = vrot.lane.b32.xlu0 %v252, 124
        %v275 = vpop.permute.xlu0 %274
        %276 = vrot.lane.b32.xlu0 %v253, 124
        %v277 = vpop.permute.xlu0 %276
        %v286 = vmax.f32 %v246, %v263
        %v287 = vmax.f32 %v247, %v265
        %v288 = vmax.f32 %v248, %v267
        %v289 = vmax.f32 %v249, %v269
        %v290 = vmax.f32 %v250, %v271
        %v291 = vmax.f32 %v251, %v273
        %v292 = vmax.f32 %v252, %v275
        %v293 = vmax.f32 %v253, %v277
        %s294 = scalar_lea.vmem [#allocation2], 16
        %295 = vst.msk [vmem:[%s294 + $0x1] sm:$0xff] %vm202, %v286
        %296 = vst.msk [vmem:[%s294 + $0x11] sm:$0xff] %vm202, %v287
        %297 = vst.msk [vmem:[%s294 + $0x21] sm:$0xff] %vm202, %v288
        %298 = vst.msk [vmem:[%s294 + $0x31] sm:$0xff] %vm202, %v289
        %299 = vst.msk [vmem:[%s294 + $0x41] sm:$0xff] %vm202, %v290
        %300 = vst.msk [vmem:[%s294 + $0x51] sm:$0xff] %vm202, %v291
        %301 = vst.msk [vmem:[%s294 + $0x61] sm:$0xff] %vm202, %v292
        %302 = vst.msk [vmem:[%s294 + $0x71] sm:$0xff] %vm202, %v293
        %v303 = vld [vmem:[%s1] sm:$0xf]
        %v304 = vld [vmem:[%s1 + $0x4] sm:$0xf]
        %v305 = vld [vmem:[%s1 + $0x8] sm:$0xf]
        %v306 = vld [vmem:[%s1 + $0xc] sm:$0xf]
        %v307 = vld [vmem:[%s1 + $0x10] sm:$0xf]
        %v308 = vld [vmem:[%s1 + $0x14] sm:$0xf]
        %v309 = vld [vmem:[%s1 + $0x18] sm:$0xf]
        %v310 = vld [vmem:[%s1 + $0x1c] sm:$0xf]
        %v311 = vld [vmem:[%s1 + $0x20] sm:$0xf]
        %v312 = vld [vmem:[#allocation2] sm:$0xff]
        %v313 = vld [vmem:[#allocation2 + $0x10] sm:$0xff]
        %v314 = vld [vmem:[#allocation2 + $0x20] sm:$0xff]
        %v315 = vld [vmem:[#allocation2 + $0x30] sm:$0xff]
        %v316 = vld [vmem:[#allocation2 + $0x40] sm:$0xff]
        %v317 = vld [vmem:[#allocation2 + $0x50] sm:$0xff]
        %v318 = vld [vmem:[#allocation2 + $0x60] sm:$0xff]
        %v319 = vld [vmem:[#allocation2 + $0x70] sm:$0xff]
        %v320 = vld [vmem:[#allocation2 + $0x1] sm:$0xff]
        %v321 = vld [vmem:[#allocation2 + $0x11] sm:$0xff]
        %v322 = vld [vmem:[#allocation2 + $0x21] sm:$0xff]
        %v323 = vld [vmem:[#allocation2 + $0x31] sm:$0xff]
        %v324 = vld [vmem:[#allocation2 + $0x41] sm:$0xff]
        %v325 = vld [vmem:[#allocation2 + $0x51] sm:$0xff]
        %v326 = vld [vmem:[#allocation2 + $0x61] sm:$0xff]
        %v327 = vld [vmem:[#allocation2 + $0x71] sm:$0xff]
        %v329 = vsel %vm202, %v320, 0
        %v332 = vsel %vm202, %v321, 0
        %v335 = vsel %vm202, %v322, 0
        %v338 = vsel %vm202, %v323, 0
        %v341 = vsel %vm202, %v324, 0
        %v344 = vsel %vm202, %v325, 0
        %v347 = vsel %vm202, %v326, 0
        %v350 = vsel %vm202, %v327, 0
        %vm352 = vcmask 1043456
        %v354 = vsel %vm352, %v304, 0
        %356 = vmatprep.subr.mxu0 0.0
        %357 = vmatpush1.msra.mxu0 0.0
        %358 = vmatprep.subr.mxu0 0.0
        %359 = vmatpush1.msra.mxu0 0.0
        %360 = vmatprep.subr.mxu0 0.0
        %361 = vmatpush1.msra.mxu0 0.0
        %362 = vmatprep.subr.mxu0 0.0
        %363 = vmatpush1.msra.mxu0 0.0
        %364 = vmatprep.subr.mxu0 0.0
        %365 = vmatpush1.msra.mxu0 0.0
        %366 = vmatprep.subr.mxu0 0.0
        %367 = vmatpush1.msra.mxu0 0.0
        %368 = vmatprep.subr.mxu0 0.0
        %369 = vmatpush1.msra.mxu0 0.0
        %370 = vmatprep.subr.mxu0 0.0
        %371 = vmatpush1.msra.mxu0 0.0
        %372 = vmatprep.subr.mxu0 0.0
        %373 = vmatpush1.msra.mxu0 0.0
        %374 = vmatprep.subr.mxu0 0.0
        %375 = vmatpush1.msra.mxu0 0.0
        %376 = vmatprep.subr.mxu0 0.0
        %377 = vmatpush1.msra.mxu0 0.0
        %378 = vmatprep.subr.mxu0 0.0
        %379 = vmatpush1.msra.mxu0 0.0
        %380 = vmatprep.subr.mxu0 0.0
        %381 = vmatpush1.msra.mxu0 0.0
        %382 = vmatprep.subr.mxu0 0.0
        %383 = vmatpush1.msra.mxu0 0.0
        %384 = vmatprep.subr.mxu0 0.0
        %385 = vmatpush1.msra.mxu0 0.0
        %386 = vmatprep.subr.mxu0 0.0
        %387 = vmatpush1.msra.mxu0 %v354
        %388 = vmatprep.subr.mxu0 0.0
        %389 = vmatpush2.msra.mxu0 0.0
        %390 = vmatprep.subr.mxu0 0.0
        %391 = vmatpush2.msra.mxu0 0.0
        %392 = vmatprep.subr.mxu0 0.0
        %393 = vmatpush2.msra.mxu0 0.0
        %394 = vmatprep.subr.mxu0 0.0
        %395 = vmatpush2.msra.mxu0 0.0
        %396 = vmatprep.subr.mxu0 0.0
        %397 = vmatpush2.msra.mxu0 0.0
        %398 = vmatprep.subr.mxu0 0.0
        %399 = vmatpush2.msra.mxu0 0.0
        %400 = vmatprep.subr.mxu0 0.0
        %401 = vmatpush2.msra.mxu0 0.0
        %402 = vmatprep.subr.mxu0 0.0
        %403 = vmatpush2.msra.mxu0 0.0
        %404 = vmatprep.subr.mxu0 0.0
        %405 = vmatpush2.msra.mxu0 0.0
        %406 = vmatprep.subr.mxu0 0.0
        %407 = vmatpush2.msra.mxu0 0.0
        %408 = vmatprep.subr.mxu0 0.0
        %409 = vmatpush2.msra.mxu0 0.0
        %410 = vmatprep.subr.mxu0 0.0
        %411 = vmatpush2.msra.mxu0 0.0
        %412 = vmatprep.subr.mxu0 0.0
        %413 = vmatpush2.msra.mxu0 0.0
        %414 = vmatprep.subr.mxu0 0.0
        %415 = vmatpush2.msra.mxu0 0.0
        %416 = vmatprep.subr.mxu0 0.0
        %417 = vmatpush2.msra.mxu0 0.0
        %418 = vmatprep.subr.mxu0 0.0
        %419 = vmatpush2.msra.mxu0 0.0
        %420 = vmatprep.mubr.f32.mxu0 0.0
        %421 = vmatmul.mubr.f32.gmra.mxu0 %v329
        %v422 = vpop.f32.mrf.mxu0
        %v423 = vadd.f32 0.0, %v422
        %v424 = vpop.f32.mrf.mxu0
        %425 = vmatprep.mubr.f32.mxu0 0.0
        %426 = vmatmul.mubr.f32.gmra.mxu0 %v332
        %v427 = vpop.f32.mrf.mxu0
        %v428 = vadd.f32 0.0, %v427
        %v429 = vpop.f32.mrf.mxu0
        %430 = vmatprep.mubr.f32.mxu0 0.0
        %431 = vmatmul.mubr.f32.gmra.mxu0 %v335
        %v432 = vpop.f32.mrf.mxu0
        %v433 = vadd.f32 0.0, %v432
        %v434 = vpop.f32.mrf.mxu0
        %435 = vmatprep.mubr.f32.mxu0 0.0
        %436 = vmatmul.mubr.f32.gmra.mxu0 %v338
        %v437 = vpop.f32.mrf.mxu0
        %v438 = vadd.f32 0.0, %v437
        %v439 = vpop.f32.mrf.mxu0
        %440 = vmatprep.mubr.f32.mxu0 0.0
        %441 = vmatmul.mubr.f32.gmra.mxu0 %v341
        %v442 = vpop.f32.mrf.mxu0
        %v443 = vadd.f32 0.0, %v442
        %v444 = vpop.f32.mrf.mxu0
        %445 = vmatprep.mubr.f32.mxu0 0.0
        %446 = vmatmul.mubr.f32.gmra.mxu0 %v344
        %v447 = vpop.f32.mrf.mxu0
        %v448 = vadd.f32 0.0, %v447
        %v449 = vpop.f32.mrf.mxu0
        %450 = vmatprep.mubr.f32.mxu0 0.0
        %451 = vmatmul.mubr.f32.gmra.mxu0 %v347
        %v452 = vpop.f32.mrf.mxu0
        %v453 = vadd.f32 0.0, %v452
        %v454 = vpop.f32.mrf.mxu0
        %455 = vmatprep.mubr.f32.mxu0 0.0
        %456 = vmatmul.mubr.f32.gmra.mxu0 %v350
        %v457 = vpop.f32.mrf.mxu0
        %v458 = vadd.f32 0.0, %v457
        %v459 = vpop.f32.mrf.mxu0
        %460 = vdwg.mxu0
        %v462 = vsel %vm202, %v312, 0
        %v465 = vsel %vm202, %v313, 0
        %v468 = vsel %vm202, %v314, 0
        %v471 = vsel %vm202, %v315, 0
        %v474 = vsel %vm202, %v316, 0
        %v477 = vsel %vm202, %v317, 0
        %v480 = vsel %vm202, %v318, 0
        %v483 = vsel %vm202, %v319, 0
        %v486 = vsel %vm352, %v303, 0
        %488 = vmatprep.subr.mxu0 0.0
        %489 = vmatpush1.msra.mxu0 0.0
        %490 = vmatprep.subr.mxu0 0.0
        %491 = vmatpush1.msra.mxu0 0.0
        %492 = vmatprep.subr.mxu0 0.0
        %493 = vmatpush1.msra.mxu0 0.0
        %494 = vmatprep.subr.mxu0 0.0
        %495 = vmatpush1.msra.mxu0 0.0
        %496 = vmatprep.subr.mxu0 0.0
        %497 = vmatpush1.msra.mxu0 0.0
        %498 = vmatprep.subr.mxu0 0.0
        %499 = vmatpush1.msra.mxu0 0.0
        %500 = vmatprep.subr.mxu0 0.0
        %501 = vmatpush1.msra.mxu0 0.0
        %502 = vmatprep.subr.mxu0 0.0
        %503 = vmatpush1.msra.mxu0 0.0
        %504 = vmatprep.subr.mxu0 0.0
        %505 = vmatpush1.msra.mxu0 0.0
        %506 = vmatprep.subr.mxu0 0.0
        %507 = vmatpush1.msra.mxu0 0.0
        %508 = vmatprep.subr.mxu0 0.0
        %509 = vmatpush1.msra.mxu0 0.0
        %510 = vmatprep.subr.mxu0 0.0
        %511 = vmatpush1.msra.mxu0 0.0
        %512 = vmatprep.subr.mxu0 0.0
        %513 = vmatpush1.msra.mxu0 0.0
        %514 = vmatprep.subr.mxu0 0.0
        %515 = vmatpush1.msra.mxu0 0.0
        %516 = vmatprep.subr.mxu0 0.0
        %517 = vmatpush1.msra.mxu0 0.0
        %518 = vmatprep.subr.mxu0 0.0
        %519 = vmatpush1.msra.mxu0 %v486
        %520 = vmatprep.subr.mxu0 0.0
        %521 = vmatpush2.msra.mxu0 0.0
        %522 = vmatprep.subr.mxu0 0.0
        %523 = vmatpush2.msra.mxu0 0.0
        %524 = vmatprep.subr.mxu0 0.0
        %525 = vmatpush2.msra.mxu0 0.0
        %526 = vmatprep.subr.mxu0 0.0
        %527 = vmatpush2.msra.mxu0 0.0
        %528 = vmatprep.subr.mxu0 0.0
        %529 = vmatpush2.msra.mxu0 0.0
        %530 = vmatprep.subr.mxu0 0.0
        %531 = vmatpush2.msra.mxu0 0.0
        %532 = vmatprep.subr.mxu0 0.0
        %533 = vmatpush2.msra.mxu0 0.0
        %534 = vmatprep.subr.mxu0 0.0
        %535 = vmatpush2.msra.mxu0 0.0
        %536 = vmatprep.subr.mxu0 0.0
        %537 = vmatpush2.msra.mxu0 0.0
        %538 = vmatprep.subr.mxu0 0.0
        %539 = vmatpush2.msra.mxu0 0.0
        %540 = vmatprep.subr.mxu0 0.0
        %541 = vmatpush2.msra.mxu0 0.0
        %542 = vmatprep.subr.mxu0 0.0
        %543 = vmatpush2.msra.mxu0 0.0
        %544 = vmatprep.subr.mxu0 0.0
        %545 = vmatpush2.msra.mxu0 0.0
        %546 = vmatprep.subr.mxu0 0.0
        %547 = vmatpush2.msra.mxu0 0.0
        %548 = vmatprep.subr.mxu0 0.0
        %549 = vmatpush2.msra.mxu0 0.0
        %550 = vmatprep.subr.mxu0 0.0
        %551 = vmatpush2.msra.mxu0 0.0
        %552 = vmatprep.mubr.f32.mxu0 0.0
        %553 = vmatmul.mubr.f32.gmra.mxu0 %v462
        %v554 = vpop.f32.mrf.mxu0
        %v555 = vadd.f32 %v423, %v554
        %v556 = vpop.f32.mrf.mxu0
        %557 = vmatprep.mubr.f32.mxu0 0.0
        %558 = vmatmul.mubr.f32.gmra.mxu0 %v465
        %v559 = vpop.f32.mrf.mxu0
        %v560 = vadd.f32 %v428, %v559
        %v561 = vpop.f32.mrf.mxu0
        %562 = vmatprep.mubr.f32.mxu0 0.0
        %563 = vmatmul.mubr.f32.gmra.mxu0 %v468
        %v564 = vpop.f32.mrf.mxu0
        %v565 = vadd.f32 %v433, %v564
        %v566 = vpop.f32.mrf.mxu0
        %567 = vmatprep.mubr.f32.mxu0 0.0
        %568 = vmatmul.mubr.f32.gmra.mxu0 %v471
        %v569 = vpop.f32.mrf.mxu0
        %v570 = vadd.f32 %v438, %v569
        %v571 = vpop.f32.mrf.mxu0
        %572 = vmatprep.mubr.f32.mxu0 0.0
        %573 = vmatmul.mubr.f32.gmra.mxu0 %v474
        %v574 = vpop.f32.mrf.mxu0
        %v575 = vadd.f32 %v443, %v574
        %v576 = vpop.f32.mrf.mxu0
        %577 = vmatprep.mubr.f32.mxu0 0.0
        %578 = vmatmul.mubr.f32.gmra.mxu0 %v477
        %v579 = vpop.f32.mrf.mxu0
        %v580 = vadd.f32 %v448, %v579
        %v581 = vpop.f32.mrf.mxu0
        %582 = vmatprep.mubr.f32.mxu0 0.0
        %583 = vmatmul.mubr.f32.gmra.mxu0 %v480
        %v584 = vpop.f32.mrf.mxu0
        %v585 = vadd.f32 %v453, %v584
        %v586 = vpop.f32.mrf.mxu0
        %587 = vmatprep.mubr.f32.mxu0 0.0
        %588 = vmatmul.mubr.f32.gmra.mxu0 %v483
        %v589 = vpop.f32.mrf.mxu0
        %v590 = vadd.f32 %v458, %v589
        %v591 = vpop.f32.mrf.mxu0
        %592 = vdwg.mxu0
        %v593 = vld [vmem:[#allocation2 + $0x2] sm:$0xff]
        %v594 = vld [vmem:[#allocation2 + $0x12] sm:$0xff]
        %v595 = vld [vmem:[#allocation2 + $0x22] sm:$0xff]
        %v596 = vld [vmem:[#allocation2 + $0x32] sm:$0xff]
        %v597 = vld [vmem:[#allocation2 + $0x42] sm:$0xff]
        %v598 = vld [vmem:[#allocation2 + $0x52] sm:$0xff]
        %v599 = vld [vmem:[#allocation2 + $0x62] sm:$0xff]
        %v600 = vld [vmem:[#allocation2 + $0x72] sm:$0xff]
        %v602 = vsel %vm202, %v593, 0
        %v605 = vsel %vm202, %v594, 0
        %v608 = vsel %vm202, %v595, 0
        %v611 = vsel %vm202, %v596, 0
        %v614 = vsel %vm202, %v597, 0
        %v617 = vsel %vm202, %v598, 0
        %v620 = vsel %vm202, %v599, 0
        %v623 = vsel %vm202, %v600, 0
        %v626 = vsel %vm352, %v305, 0
        %628 = vmatprep.subr.mxu0 0.0
        %629 = vmatpush1.msra.mxu0 0.0
        %630 = vmatprep.subr.mxu0 0.0
        %631 = vmatpush1.msra.mxu0 0.0
        %632 = vmatprep.subr.mxu0 0.0
        %633 = vmatpush1.msra.mxu0 0.0
        %634 = vmatprep.subr.mxu0 0.0
        %635 = vmatpush1.msra.mxu0 0.0
        %636 = vmatprep.subr.mxu0 0.0
        %637 = vmatpush1.msra.mxu0 0.0
        %638 = vmatprep.subr.mxu0 0.0
        %639 = vmatpush1.msra.mxu0 0.0
        %640 = vmatprep.subr.mxu0 0.0
        %641 = vmatpush1.msra.mxu0 0.0
        %642 = vmatprep.subr.mxu0 0.0
        %643 = vmatpush1.msra.mxu0 0.0
        %644 = vmatprep.subr.mxu0 0.0
        %645 = vmatpush1.msra.mxu0 0.0
        %646 = vmatprep.subr.mxu0 0.0
        %647 = vmatpush1.msra.mxu0 0.0
        %648 = vmatprep.subr.mxu0 0.0
        %649 = vmatpush1.msra.mxu0 0.0
        %650 = vmatprep.subr.mxu0 0.0
        %651 = vmatpush1.msra.mxu0 0.0
        %652 = vmatprep.subr.mxu0 0.0
        %653 = vmatpush1.msra.mxu0 0.0
        %654 = vmatprep.subr.mxu0 0.0
        %655 = vmatpush1.msra.mxu0 0.0
        %656 = vmatprep.subr.mxu0 0.0
        %657 = vmatpush1.msra.mxu0 0.0
        %658 = vmatprep.subr.mxu0 0.0
        %659 = vmatpush1.msra.mxu0 %v626
        %660 = vmatprep.subr.mxu0 0.0
        %661 = vmatpush2.msra.mxu0 0.0
        %662 = vmatprep.subr.mxu0 0.0
        %663 = vmatpush2.msra.mxu0 0.0
        %664 = vmatprep.subr.mxu0 0.0
        %665 = vmatpush2.msra.mxu0 0.0
        %666 = vmatprep.subr.mxu0 0.0
        %667 = vmatpush2.msra.mxu0 0.0
        %668 = vmatprep.subr.mxu0 0.0
        %669 = vmatpush2.msra.mxu0 0.0
        %670 = vmatprep.subr.mxu0 0.0
        %671 = vmatpush2.msra.mxu0 0.0
        %672 = vmatprep.subr.mxu0 0.0
        %673 = vmatpush2.msra.mxu0 0.0
        %674 = vmatprep.subr.mxu0 0.0
        %675 = vmatpush2.msra.mxu0 0.0
        %676 = vmatprep.subr.mxu0 0.0
        %677 = vmatpush2.msra.mxu0 0.0
        %678 = vmatprep.subr.mxu0 0.0
        %679 = vmatpush2.msra.mxu0 0.0
        %680 = vmatprep.subr.mxu0 0.0
        %681 = vmatpush2.msra.mxu0 0.0
        %682 = vmatprep.subr.mxu0 0.0
        %683 = vmatpush2.msra.mxu0 0.0
        %684 = vmatprep.subr.mxu0 0.0
        %685 = vmatpush2.msra.mxu0 0.0
        %686 = vmatprep.subr.mxu0 0.0
        %687 = vmatpush2.msra.mxu0 0.0
        %688 = vmatprep.subr.mxu0 0.0
        %689 = vmatpush2.msra.mxu0 0.0
        %690 = vmatprep.subr.mxu0 0.0
        %691 = vmatpush2.msra.mxu0 0.0
        %692 = vmatprep.mubr.f32.mxu0 0.0
        %693 = vmatmul.mubr.f32.gmra.mxu0 %v602
        %v694 = vpop.f32.mrf.mxu0
        %v695 = vadd.f32 0.0, %v694
        %v696 = vpop.f32.mrf.mxu0
        %697 = vmatprep.mubr.f32.mxu0 0.0
        %698 = vmatmul.mubr.f32.gmra.mxu0 %v605
        %v699 = vpop.f32.mrf.mxu0
        %v700 = vadd.f32 0.0, %v699
        %v701 = vpop.f32.mrf.mxu0
        %702 = vmatprep.mubr.f32.mxu0 0.0
        %703 = vmatmul.mubr.f32.gmra.mxu0 %v608
        %v704 = vpop.f32.mrf.mxu0
        %v705 = vadd.f32 0.0, %v704
        %v706 = vpop.f32.mrf.mxu0
        %707 = vmatprep.mubr.f32.mxu0 0.0
        %708 = vmatmul.mubr.f32.gmra.mxu0 %v611
        %v709 = vpop.f32.mrf.mxu0
        %v710 = vadd.f32 0.0, %v709
        %v711 = vpop.f32.mrf.mxu0
        %712 = vmatprep.mubr.f32.mxu0 0.0
        %713 = vmatmul.mubr.f32.gmra.mxu0 %v614
        %v714 = vpop.f32.mrf.mxu0
        %v715 = vadd.f32 0.0, %v714
        %v716 = vpop.f32.mrf.mxu0
        %717 = vmatprep.mubr.f32.mxu0 0.0
        %718 = vmatmul.mubr.f32.gmra.mxu0 %v617
        %v719 = vpop.f32.mrf.mxu0
        %v720 = vadd.f32 0.0, %v719
        %v721 = vpop.f32.mrf.mxu0
        %722 = vmatprep.mubr.f32.mxu0 0.0
        %723 = vmatmul.mubr.f32.gmra.mxu0 %v620
        %v724 = vpop.f32.mrf.mxu0
        %v725 = vadd.f32 0.0, %v724
        %v726 = vpop.f32.mrf.mxu0
        %727 = vmatprep.mubr.f32.mxu0 0.0
        %728 = vmatmul.mubr.f32.gmra.mxu0 %v623
        %v729 = vpop.f32.mrf.mxu0
        %v730 = vadd.f32 0.0, %v729
        %v731 = vpop.f32.mrf.mxu0
        %732 = vdwg.mxu0
        %v733 = vadd.f32 %v555, %v695
        %v734 = vadd.f32 %v560, %v700
        %v735 = vadd.f32 %v565, %v705
        %v736 = vadd.f32 %v570, %v710
        %v737 = vadd.f32 %v575, %v715
        %v738 = vadd.f32 %v580, %v720
        %v739 = vadd.f32 %v585, %v725
        %v740 = vadd.f32 %v590, %v730
        %v741 = vld [vmem:[%s294] sm:$0xff]
        %v742 = vld [vmem:[%s294 + $0x10] sm:$0xff]
        %v743 = vld [vmem:[%s294 + $0x20] sm:$0xff]
        %v744 = vld [vmem:[%s294 + $0x30] sm:$0xff]
        %v745 = vld [vmem:[%s294 + $0x40] sm:$0xff]
        %v746 = vld [vmem:[%s294 + $0x50] sm:$0xff]
        %v747 = vld [vmem:[%s294 + $0x60] sm:$0xff]
        %v748 = vld [vmem:[%s294 + $0x70] sm:$0xff]
        %v750 = vsel %vm202, %v741, 0
        %v753 = vsel %vm202, %v742, 0
        %v756 = vsel %vm202, %v743, 0
        %v759 = vsel %vm202, %v744, 0
        %v762 = vsel %vm202, %v745, 0
        %v765 = vsel %vm202, %v746, 0
        %v768 = vsel %vm202, %v747, 0
        %v771 = vsel %vm202, %v748, 0
        %v774 = vsel %vm352, %v306, 0
        %776 = vmatprep.subr.mxu0 0.0
        %777 = vmatpush1.msra.mxu0 0.0
        %778 = vmatprep.subr.mxu0 0.0
        %779 = vmatpush1.msra.mxu0 0.0
        %780 = vmatprep.subr.mxu0 0.0
        %781 = vmatpush1.msra.mxu0 0.0
        %782 = vmatprep.subr.mxu0 0.0
        %783 = vmatpush1.msra.mxu0 0.0
        %784 = vmatprep.subr.mxu0 0.0
        %785 = vmatpush1.msra.mxu0 0.0
        %786 = vmatprep.subr.mxu0 0.0
        %787 = vmatpush1.msra.mxu0 0.0
        %788 = vmatprep.subr.mxu0 0.0
        %789 = vmatpush1.msra.mxu0 0.0
        %790 = vmatprep.subr.mxu0 0.0
        %791 = vmatpush1.msra.mxu0 0.0
        %792 = vmatprep.subr.mxu0 0.0
        %793 = vmatpush1.msra.mxu0 0.0
        %794 = vmatprep.subr.mxu0 0.0
        %795 = vmatpush1.msra.mxu0 0.0
        %796 = vmatprep.subr.mxu0 0.0
        %797 = vmatpush1.msra.mxu0 0.0
        %798 = vmatprep.subr.mxu0 0.0
        %799 = vmatpush1.msra.mxu0 0.0
        %800 = vmatprep.subr.mxu0 0.0
        %801 = vmatpush1.msra.mxu0 0.0
        %802 = vmatprep.subr.mxu0 0.0
        %803 = vmatpush1.msra.mxu0 0.0
        %804 = vmatprep.subr.mxu0 0.0
        %805 = vmatpush1.msra.mxu0 0.0
        %806 = vmatprep.subr.mxu0 0.0
        %807 = vmatpush1.msra.mxu0 %v774
        %808 = vmatprep.subr.mxu0 0.0
        %809 = vmatpush2.msra.mxu0 0.0
        %810 = vmatprep.subr.mxu0 0.0
        %811 = vmatpush2.msra.mxu0 0.0
        %812 = vmatprep.subr.mxu0 0.0
        %813 = vmatpush2.msra.mxu0 0.0
        %814 = vmatprep.subr.mxu0 0.0
        %815 = vmatpush2.msra.mxu0 0.0
        %816 = vmatprep.subr.mxu0 0.0
        %817 = vmatpush2.msra.mxu0 0.0
        %818 = vmatprep.subr.mxu0 0.0
        %819 = vmatpush2.msra.mxu0 0.0
        %820 = vmatprep.subr.mxu0 0.0
        %821 = vmatpush2.msra.mxu0 0.0
        %822 = vmatprep.subr.mxu0 0.0
        %823 = vmatpush2.msra.mxu0 0.0
        %824 = vmatprep.subr.mxu0 0.0
        %825 = vmatpush2.msra.mxu0 0.0
        %826 = vmatprep.subr.mxu0 0.0
        %827 = vmatpush2.msra.mxu0 0.0
        %828 = vmatprep.subr.mxu0 0.0
        %829 = vmatpush2.msra.mxu0 0.0
        %830 = vmatprep.subr.mxu0 0.0
        %831 = vmatpush2.msra.mxu0 0.0
        %832 = vmatprep.subr.mxu0 0.0
        %833 = vmatpush2.msra.mxu0 0.0
        %834 = vmatprep.subr.mxu0 0.0
        %835 = vmatpush2.msra.mxu0 0.0
        %836 = vmatprep.subr.mxu0 0.0
        %837 = vmatpush2.msra.mxu0 0.0
        %838 = vmatprep.subr.mxu0 0.0
        %839 = vmatpush2.msra.mxu0 0.0
        %840 = vmatprep.mubr.f32.mxu0 0.0
        %841 = vmatmul.mubr.f32.gmra.mxu0 %v750
        %v842 = vpop.f32.mrf.mxu0
        %v843 = vadd.f32 0.0, %v842
        %v844 = vpop.f32.mrf.mxu0
        %845 = vmatprep.mubr.f32.mxu0 0.0
        %846 = vmatmul.mubr.f32.gmra.mxu0 %v753
        %v847 = vpop.f32.mrf.mxu0
        %v848 = vadd.f32 0.0, %v847
        %v849 = vpop.f32.mrf.mxu0
        %850 = vmatprep.mubr.f32.mxu0 0.0
        %851 = vmatmul.mubr.f32.gmra.mxu0 %v756
        %v852 = vpop.f32.mrf.mxu0
        %v853 = vadd.f32 0.0, %v852
        %v854 = vpop.f32.mrf.mxu0
        %855 = vmatprep.mubr.f32.mxu0 0.0
        %856 = vmatmul.mubr.f32.gmra.mxu0 %v759
        %v857 = vpop.f32.mrf.mxu0
        %v858 = vadd.f32 0.0, %v857
        %v859 = vpop.f32.mrf.mxu0
        %860 = vmatprep.mubr.f32.mxu0 0.0
        %861 = vmatmul.mubr.f32.gmra.mxu0 %v762
        %v862 = vpop.f32.mrf.mxu0
        %v863 = vadd.f32 0.0, %v862
        %v864 = vpop.f32.mrf.mxu0
        %865 = vmatprep.mubr.f32.mxu0 0.0
        %866 = vmatmul.mubr.f32.gmra.mxu0 %v765
        %v867 = vpop.f32.mrf.mxu0
        %v868 = vadd.f32 0.0, %v867
        %v869 = vpop.f32.mrf.mxu0
        %870 = vmatprep.mubr.f32.mxu0 0.0
        %871 = vmatmul.mubr.f32.gmra.mxu0 %v768
        %v872 = vpop.f32.mrf.mxu0
        %v873 = vadd.f32 0.0, %v872
        %v874 = vpop.f32.mrf.mxu0
        %875 = vmatprep.mubr.f32.mxu0 0.0
        %876 = vmatmul.mubr.f32.gmra.mxu0 %v771
        %v877 = vpop.f32.mrf.mxu0
        %v878 = vadd.f32 0.0, %v877
        %v879 = vpop.f32.mrf.mxu0
        %880 = vdwg.mxu0
        %v881 = vadd.f32 %v733, %v843
        %v882 = vadd.f32 %v734, %v848
        %v883 = vadd.f32 %v735, %v853
        %v884 = vadd.f32 %v736, %v858
        %v885 = vadd.f32 %v737, %v863
        %v886 = vadd.f32 %v738, %v868
        %v887 = vadd.f32 %v739, %v873
        %v888 = vadd.f32 %v740, %v878
        %v889 = vld [vmem:[%s294 + $0x1] sm:$0xff]
        %v890 = vld [vmem:[%s294 + $0x11] sm:$0xff]
        %v891 = vld [vmem:[%s294 + $0x21] sm:$0xff]
        %v892 = vld [vmem:[%s294 + $0x31] sm:$0xff]
        %v893 = vld [vmem:[%s294 + $0x41] sm:$0xff]
        %v894 = vld [vmem:[%s294 + $0x51] sm:$0xff]
        %v895 = vld [vmem:[%s294 + $0x61] sm:$0xff]
        %v896 = vld [vmem:[%s294 + $0x71] sm:$0xff]
        %v898 = vsel %vm202, %v889, 0
        %v901 = vsel %vm202, %v890, 0
        %v904 = vsel %vm202, %v891, 0
        %v907 = vsel %vm202, %v892, 0
        %v910 = vsel %vm202, %v893, 0
        %v913 = vsel %vm202, %v894, 0
        %v916 = vsel %vm202, %v895, 0
        %v919 = vsel %vm202, %v896, 0
        %v922 = vsel %vm352, %v307, 0
        %924 = vmatprep.subr.mxu0 0.0
        %925 = vmatpush1.msra.mxu0 0.0
        %926 = vmatprep.subr.mxu0 0.0
        %927 = vmatpush1.msra.mxu0 0.0
        %928 = vmatprep.subr.mxu0 0.0
        %929 = vmatpush1.msra.mxu0 0.0
        %930 = vmatprep.subr.mxu0 0.0
        %931 = vmatpush1.msra.mxu0 0.0
        %932 = vmatprep.subr.mxu0 0.0
        %933 = vmatpush1.msra.mxu0 0.0
        %934 = vmatprep.subr.mxu0 0.0
        %935 = vmatpush1.msra.mxu0 0.0
        %936 = vmatprep.subr.mxu0 0.0
        %937 = vmatpush1.msra.mxu0 0.0
        %938 = vmatprep.subr.mxu0 0.0
        %939 = vmatpush1.msra.mxu0 0.0
        %940 = vmatprep.subr.mxu0 0.0
        %941 = vmatpush1.msra.mxu0 0.0
        %942 = vmatprep.subr.mxu0 0.0
        %943 = vmatpush1.msra.mxu0 0.0
        %944 = vmatprep.subr.mxu0 0.0
        %945 = vmatpush1.msra.mxu0 0.0
        %946 = vmatprep.subr.mxu0 0.0
        %947 = vmatpush1.msra.mxu0 0.0
        %948 = vmatprep.subr.mxu0 0.0
        %949 = vmatpush1.msra.mxu0 0.0
        %950 = vmatprep.subr.mxu0 0.0
        %951 = vmatpush1.msra.mxu0 0.0
        %952 = vmatprep.subr.mxu0 0.0
        %953 = vmatpush1.msra.mxu0 0.0
        %954 = vmatprep.subr.mxu0 0.0
        %955 = vmatpush1.msra.mxu0 %v922
        %956 = vmatprep.subr.mxu0 0.0
        %957 = vmatpush2.msra.mxu0 0.0
        %958 = vmatprep.subr.mxu0 0.0
        %959 = vmatpush2.msra.mxu0 0.0
        %960 = vmatprep.subr.mxu0 0.0
        %961 = vmatpush2.msra.mxu0 0.0
        %962 = vmatprep.subr.mxu0 0.0
        %963 = vmatpush2.msra.mxu0 0.0
        %964 = vmatprep.subr.mxu0 0.0
        %965 = vmatpush2.msra.mxu0 0.0
        %966 = vmatprep.subr.mxu0 0.0
        %967 = vmatpush2.msra.mxu0 0.0
        %968 = vmatprep.subr.mxu0 0.0
        %969 = vmatpush2.msra.mxu0 0.0
        %970 = vmatprep.subr.mxu0 0.0
        %971 = vmatpush2.msra.mxu0 0.0
        %972 = vmatprep.subr.mxu0 0.0
        %973 = vmatpush2.msra.mxu0 0.0
        %974 = vmatprep.subr.mxu0 0.0
        %975 = vmatpush2.msra.mxu0 0.0
        %976 = vmatprep.subr.mxu0 0.0
        %977 = vmatpush2.msra.mxu0 0.0
        %978 = vmatprep.subr.mxu0 0.0
        %979 = vmatpush2.msra.mxu0 0.0
        %980 = vmatprep.subr.mxu0 0.0
        %981 = vmatpush2.msra.mxu0 0.0
        %982 = vmatprep.subr.mxu0 0.0
        %983 = vmatpush2.msra.mxu0 0.0
        %984 = vmatprep.subr.mxu0 0.0
        %985 = vmatpush2.msra.mxu0 0.0
        %986 = vmatprep.subr.mxu0 0.0
        %987 = vmatpush2.msra.mxu0 0.0
        %988 = vmatprep.mubr.f32.mxu0 0.0
        %989 = vmatmul.mubr.f32.gmra.mxu0 %v898
        %v990 = vpop.f32.mrf.mxu0
        %v991 = vadd.f32 0.0, %v990
        %v992 = vpop.f32.mrf.mxu0
        %993 = vmatprep.mubr.f32.mxu0 0.0
        %994 = vmatmul.mubr.f32.gmra.mxu0 %v901
        %v995 = vpop.f32.mrf.mxu0
        %v996 = vadd.f32 0.0, %v995
        %v997 = vpop.f32.mrf.mxu0
        %998 = vmatprep.mubr.f32.mxu0 0.0
        %999 = vmatmul.mubr.f32.gmra.mxu0 %v904
        %v1000 = vpop.f32.mrf.mxu0
        %v1001 = vadd.f32 0.0, %v1000
        %v1002 = vpop.f32.mrf.mxu0
        %1003 = vmatprep.mubr.f32.mxu0 0.0
        %1004 = vmatmul.mubr.f32.gmra.mxu0 %v907
        %v1005 = vpop.f32.mrf.mxu0
        %v1006 = vadd.f32 0.0, %v1005
        %v1007 = vpop.f32.mrf.mxu0
        %1008 = vmatprep.mubr.f32.mxu0 0.0
        %1009 = vmatmul.mubr.f32.gmra.mxu0 %v910
        %v1010 = vpop.f32.mrf.mxu0
        %v1011 = vadd.f32 0.0, %v1010
        %v1012 = vpop.f32.mrf.mxu0
        %1013 = vmatprep.mubr.f32.mxu0 0.0
        %1014 = vmatmul.mubr.f32.gmra.mxu0 %v913
        %v1015 = vpop.f32.mrf.mxu0
        %v1016 = vadd.f32 0.0, %v1015
        %v1017 = vpop.f32.mrf.mxu0
        %1018 = vmatprep.mubr.f32.mxu0 0.0
        %1019 = vmatmul.mubr.f32.gmra.mxu0 %v916
        %v1020 = vpop.f32.mrf.mxu0
        %v1021 = vadd.f32 0.0, %v1020
        %v1022 = vpop.f32.mrf.mxu0
        %1023 = vmatprep.mubr.f32.mxu0 0.0
        %1024 = vmatmul.mubr.f32.gmra.mxu0 %v919
        %v1025 = vpop.f32.mrf.mxu0
        %v1026 = vadd.f32 0.0, %v1025
        %v1027 = vpop.f32.mrf.mxu0
        %1028 = vdwg.mxu0
        %v1029 = vadd.f32 %v881, %v991
        %v1030 = vadd.f32 %v882, %v996
        %v1031 = vadd.f32 %v883, %v1001
        %v1032 = vadd.f32 %v884, %v1006
        %v1033 = vadd.f32 %v885, %v1011
        %v1034 = vadd.f32 %v886, %v1016
        %v1035 = vadd.f32 %v887, %v1021
        %v1036 = vadd.f32 %v888, %v1026
        %v1037 = vld [vmem:[%s294 + $0x2] sm:$0xff]
        %v1038 = vld [vmem:[%s294 + $0x12] sm:$0xff]
        %v1039 = vld [vmem:[%s294 + $0x22] sm:$0xff]
        %v1040 = vld [vmem:[%s294 + $0x32] sm:$0xff]
        %v1041 = vld [vmem:[%s294 + $0x42] sm:$0xff]
        %v1042 = vld [vmem:[%s294 + $0x52] sm:$0xff]
        %v1043 = vld [vmem:[%s294 + $0x62] sm:$0xff]
        %v1044 = vld [vmem:[%s294 + $0x72] sm:$0xff]
        %v1046 = vsel %vm202, %v1037, 0
        %v1049 = vsel %vm202, %v1038, 0
        %v1052 = vsel %vm202, %v1039, 0
        %v1055 = vsel %vm202, %v1040, 0
        %v1058 = vsel %vm202, %v1041, 0
        %v1061 = vsel %vm202, %v1042, 0
        %v1064 = vsel %vm202, %v1043, 0
        %v1067 = vsel %vm202, %v1044, 0
        %v1070 = vsel %vm352, %v308, 0
        %1072 = vmatprep.subr.mxu0 0.0
        %1073 = vmatpush1.msra.mxu0 0.0
        %1074 = vmatprep.subr.mxu0 0.0
        %1075 = vmatpush1.msra.mxu0 0.0
        %1076 = vmatprep.subr.mxu0 0.0
        %1077 = vmatpush1.msra.mxu0 0.0
        %1078 = vmatprep.subr.mxu0 0.0
        %1079 = vmatpush1.msra.mxu0 0.0
        %1080 = vmatprep.subr.mxu0 0.0
        %1081 = vmatpush1.msra.mxu0 0.0
        %1082 = vmatprep.subr.mxu0 0.0
        %1083 = vmatpush1.msra.mxu0 0.0
        %1084 = vmatprep.subr.mxu0 0.0
        %1085 = vmatpush1.msra.mxu0 0.0
        %1086 = vmatprep.subr.mxu0 0.0
        %1087 = vmatpush1.msra.mxu0 0.0
        %1088 = vmatprep.subr.mxu0 0.0
        %1089 = vmatpush1.msra.mxu0 0.0
        %1090 = vmatprep.subr.mxu0 0.0
        %1091 = vmatpush1.msra.mxu0 0.0
        %1092 = vmatprep.subr.mxu0 0.0
        %1093 = vmatpush1.msra.mxu0 0.0
        %1094 = vmatprep.subr.mxu0 0.0
        %1095 = vmatpush1.msra.mxu0 0.0
        %1096 = vmatprep.subr.mxu0 0.0
        %1097 = vmatpush1.msra.mxu0 0.0
        %1098 = vmatprep.subr.mxu0 0.0
        %1099 = vmatpush1.msra.mxu0 0.0
        %1100 = vmatprep.subr.mxu0 0.0
        %1101 = vmatpush1.msra.mxu0 0.0
        %1102 = vmatprep.subr.mxu0 0.0
        %1103 = vmatpush1.msra.mxu0 %v1070
        %1104 = vmatprep.subr.mxu0 0.0
        %1105 = vmatpush2.msra.mxu0 0.0
        %1106 = vmatprep.subr.mxu0 0.0
        %1107 = vmatpush2.msra.mxu0 0.0
        %1108 = vmatprep.subr.mxu0 0.0
        %1109 = vmatpush2.msra.mxu0 0.0
        %1110 = vmatprep.subr.mxu0 0.0
        %1111 = vmatpush2.msra.mxu0 0.0
        %1112 = vmatprep.subr.mxu0 0.0
        %1113 = vmatpush2.msra.mxu0 0.0
        %1114 = vmatprep.subr.mxu0 0.0
        %1115 = vmatpush2.msra.mxu0 0.0
        %1116 = vmatprep.subr.mxu0 0.0
        %1117 = vmatpush2.msra.mxu0 0.0
        %1118 = vmatprep.subr.mxu0 0.0
        %1119 = vmatpush2.msra.mxu0 0.0
        %1120 = vmatprep.subr.mxu0 0.0
        %1121 = vmatpush2.msra.mxu0 0.0
        %1122 = vmatprep.subr.mxu0 0.0
        %1123 = vmatpush2.msra.mxu0 0.0
        %1124 = vmatprep.subr.mxu0 0.0
        %1125 = vmatpush2.msra.mxu0 0.0
        %1126 = vmatprep.subr.mxu0 0.0
        %1127 = vmatpush2.msra.mxu0 0.0
        %1128 = vmatprep.subr.mxu0 0.0
        %1129 = vmatpush2.msra.mxu0 0.0
        %1130 = vmatprep.subr.mxu0 0.0
        %1131 = vmatpush2.msra.mxu0 0.0
        %1132 = vmatprep.subr.mxu0 0.0
        %1133 = vmatpush2.msra.mxu0 0.0
        %1134 = vmatprep.subr.mxu0 0.0
        %1135 = vmatpush2.msra.mxu0 0.0
        %1136 = vmatprep.mubr.f32.mxu0 0.0
        %1137 = vmatmul.mubr.f32.gmra.mxu0 %v1046
        %v1138 = vpop.f32.mrf.mxu0
        %v1139 = vadd.f32 0.0, %v1138
        %v1140 = vpop.f32.mrf.mxu0
        %1141 = vmatprep.mubr.f32.mxu0 0.0
        %1142 = vmatmul.mubr.f32.gmra.mxu0 %v1049
        %v1143 = vpop.f32.mrf.mxu0
        %v1144 = vadd.f32 0.0, %v1143
        %v1145 = vpop.f32.mrf.mxu0
        %1146 = vmatprep.mubr.f32.mxu0 0.0
        %1147 = vmatmul.mubr.f32.gmra.mxu0 %v1052
        %v1148 = vpop.f32.mrf.mxu0
        %v1149 = vadd.f32 0.0, %v1148
        %v1150 = vpop.f32.mrf.mxu0
        %1151 = vmatprep.mubr.f32.mxu0 0.0
        %1152 = vmatmul.mubr.f32.gmra.mxu0 %v1055
        %v1153 = vpop.f32.mrf.mxu0
        %v1154 = vadd.f32 0.0, %v1153
        %v1155 = vpop.f32.mrf.mxu0
        %1156 = vmatprep.mubr.f32.mxu0 0.0
        %1157 = vmatmul.mubr.f32.gmra.mxu0 %v1058
        %v1158 = vpop.f32.mrf.mxu0
        %v1159 = vadd.f32 0.0, %v1158
        %v1160 = vpop.f32.mrf.mxu0
        %1161 = vmatprep.mubr.f32.mxu0 0.0
        %1162 = vmatmul.mubr.f32.gmra.mxu0 %v1061
        %v1163 = vpop.f32.mrf.mxu0
        %v1164 = vadd.f32 0.0, %v1163
        %v1165 = vpop.f32.mrf.mxu0
        %1166 = vmatprep.mubr.f32.mxu0 0.0
        %1167 = vmatmul.mubr.f32.gmra.mxu0 %v1064
        %v1168 = vpop.f32.mrf.mxu0
        %v1169 = vadd.f32 0.0, %v1168
        %v1170 = vpop.f32.mrf.mxu0
        %1171 = vmatprep.mubr.f32.mxu0 0.0
        %1172 = vmatmul.mubr.f32.gmra.mxu0 %v1067
        %v1173 = vpop.f32.mrf.mxu0
        %v1174 = vadd.f32 0.0, %v1173
        %v1175 = vpop.f32.mrf.mxu0
        %1176 = vdwg.mxu0
        %v1177 = vadd.f32 %v1029, %v1139
        %v1178 = vadd.f32 %v1030, %v1144
        %v1179 = vadd.f32 %v1031, %v1149
        %v1180 = vadd.f32 %v1032, %v1154
        %v1181 = vadd.f32 %v1033, %v1159
        %v1182 = vadd.f32 %v1034, %v1164
        %v1183 = vadd.f32 %v1035, %v1169
        %v1184 = vadd.f32 %v1036, %v1174
        %s1185 = scalar_lea.vmem [#allocation2], 32
        %v1186 = vld [vmem:[%s1185] sm:$0xff]
        %v1187 = vld [vmem:[%s1185 + $0x10] sm:$0xff]
        %v1188 = vld [vmem:[%s1185 + $0x20] sm:$0xff]
        %v1189 = vld [vmem:[%s1185 + $0x30] sm:$0xff]
        %v1190 = vld [vmem:[%s1185 + $0x40] sm:$0xff]
        %v1191 = vld [vmem:[%s1185 + $0x50] sm:$0xff]
        %v1192 = vld [vmem:[%s1185 + $0x60] sm:$0xff]
        %v1193 = vld [vmem:[%s1185 + $0x70] sm:$0xff]
        %v1195 = vsel %vm202, %v1186, 0
        %v1198 = vsel %vm202, %v1187, 0
        %v1201 = vsel %vm202, %v1188, 0
        %v1204 = vsel %vm202, %v1189, 0
        %v1207 = vsel %vm202, %v1190, 0
        %v1210 = vsel %vm202, %v1191, 0
        %v1213 = vsel %vm202, %v1192, 0
        %v1216 = vsel %vm202, %v1193, 0
        %v1219 = vsel %vm352, %v309, 0
        %1221 = vmatprep.subr.mxu0 0.0
        %1222 = vmatpush1.msra.mxu0 0.0
        %1223 = vmatprep.subr.mxu0 0.0
        %1224 = vmatpush1.msra.mxu0 0.0
        %1225 = vmatprep.subr.mxu0 0.0
        %1226 = vmatpush1.msra.mxu0 0.0
        %1227 = vmatprep.subr.mxu0 0.0
        %1228 = vmatpush1.msra.mxu0 0.0
        %1229 = vmatprep.subr.mxu0 0.0
        %1230 = vmatpush1.msra.mxu0 0.0
        %1231 = vmatprep.subr.mxu0 0.0
        %1232 = vmatpush1.msra.mxu0 0.0
        %1233 = vmatprep.subr.mxu0 0.0
        %1234 = vmatpush1.msra.mxu0 0.0
        %1235 = vmatprep.subr.mxu0 0.0
        %1236 = vmatpush1.msra.mxu0 0.0
        %1237 = vmatprep.subr.mxu0 0.0
        %1238 = vmatpush1.msra.mxu0 0.0
        %1239 = vmatprep.subr.mxu0 0.0
        %1240 = vmatpush1.msra.mxu0 0.0
        %1241 = vmatprep.subr.mxu0 0.0
        %1242 = vmatpush1.msra.mxu0 0.0
        %1243 = vmatprep.subr.mxu0 0.0
        %1244 = vmatpush1.msra.mxu0 0.0
        %1245 = vmatprep.subr.mxu0 0.0
        %1246 = vmatpush1.msra.mxu0 0.0
        %1247 = vmatprep.subr.mxu0 0.0
        %1248 = vmatpush1.msra.mxu0 0.0
        %1249 = vmatprep.subr.mxu0 0.0
        %1250 = vmatpush1.msra.mxu0 0.0
        %1251 = vmatprep.subr.mxu0 0.0
        %1252 = vmatpush1.msra.mxu0 %v1219
        %1253 = vmatprep.subr.mxu0 0.0
        %1254 = vmatpush2.msra.mxu0 0.0
        %1255 = vmatprep.subr.mxu0 0.0
        %1256 = vmatpush2.msra.mxu0 0.0
        %1257 = vmatprep.subr.mxu0 0.0
        %1258 = vmatpush2.msra.mxu0 0.0
        %1259 = vmatprep.subr.mxu0 0.0
        %1260 = vmatpush2.msra.mxu0 0.0
        %1261 = vmatprep.subr.mxu0 0.0
        %1262 = vmatpush2.msra.mxu0 0.0
        %1263 = vmatprep.subr.mxu0 0.0
        %1264 = vmatpush2.msra.mxu0 0.0
        %1265 = vmatprep.subr.mxu0 0.0
        %1266 = vmatpush2.msra.mxu0 0.0
        %1267 = vmatprep.subr.mxu0 0.0
        %1268 = vmatpush2.msra.mxu0 0.0
        %1269 = vmatprep.subr.mxu0 0.0
        %1270 = vmatpush2.msra.mxu0 0.0
        %1271 = vmatprep.subr.mxu0 0.0
        %1272 = vmatpush2.msra.mxu0 0.0
        %1273 = vmatprep.subr.mxu0 0.0
        %1274 = vmatpush2.msra.mxu0 0.0
        %1275 = vmatprep.subr.mxu0 0.0
        %1276 = vmatpush2.msra.mxu0 0.0
        %1277 = vmatprep.subr.mxu0 0.0
        %1278 = vmatpush2.msra.mxu0 0.0
        %1279 = vmatprep.subr.mxu0 0.0
        %1280 = vmatpush2.msra.mxu0 0.0
        %1281 = vmatprep.subr.mxu0 0.0
        %1282 = vmatpush2.msra.mxu0 0.0
        %1283 = vmatprep.subr.mxu0 0.0
        %1284 = vmatpush2.msra.mxu0 0.0
        %1285 = vmatprep.mubr.f32.mxu0 0.0
        %1286 = vmatmul.mubr.f32.gmra.mxu0 %v1195
        %v1287 = vpop.f32.mrf.mxu0
        %v1288 = vadd.f32 0.0, %v1287
        %v1289 = vpop.f32.mrf.mxu0
        %1290 = vmatprep.mubr.f32.mxu0 0.0
        %1291 = vmatmul.mubr.f32.gmra.mxu0 %v1198
        %v1292 = vpop.f32.mrf.mxu0
        %v1293 = vadd.f32 0.0, %v1292
        %v1294 = vpop.f32.mrf.mxu0
        %1295 = vmatprep.mubr.f32.mxu0 0.0
        %1296 = vmatmul.mubr.f32.gmra.mxu0 %v1201
        %v1297 = vpop.f32.mrf.mxu0
        %v1298 = vadd.f32 0.0, %v1297
        %v1299 = vpop.f32.mrf.mxu0
        %1300 = vmatprep.mubr.f32.mxu0 0.0
        %1301 = vmatmul.mubr.f32.gmra.mxu0 %v1204
        %v1302 = vpop.f32.mrf.mxu0
        %v1303 = vadd.f32 0.0, %v1302
        %v1304 = vpop.f32.mrf.mxu0
        %1305 = vmatprep.mubr.f32.mxu0 0.0
        %1306 = vmatmul.mubr.f32.gmra.mxu0 %v1207
        %v1307 = vpop.f32.mrf.mxu0
        %v1308 = vadd.f32 0.0, %v1307
        %v1309 = vpop.f32.mrf.mxu0
        %1310 = vmatprep.mubr.f32.mxu0 0.0
        %1311 = vmatmul.mubr.f32.gmra.mxu0 %v1210
        %v1312 = vpop.f32.mrf.mxu0
        %v1313 = vadd.f32 0.0, %v1312
        %v1314 = vpop.f32.mrf.mxu0
        %1315 = vmatprep.mubr.f32.mxu0 0.0
        %1316 = vmatmul.mubr.f32.gmra.mxu0 %v1213
        %v1317 = vpop.f32.mrf.mxu0
        %v1318 = vadd.f32 0.0, %v1317
        %v1319 = vpop.f32.mrf.mxu0
        %1320 = vmatprep.mubr.f32.mxu0 0.0
        %1321 = vmatmul.mubr.f32.gmra.mxu0 %v1216
        %v1322 = vpop.f32.mrf.mxu0
        %v1323 = vadd.f32 0.0, %v1322
        %v1324 = vpop.f32.mrf.mxu0
        %1325 = vdwg.mxu0
        %v1326 = vadd.f32 %v1177, %v1288
        %v1327 = vadd.f32 %v1178, %v1293
        %v1328 = vadd.f32 %v1179, %v1298
        %v1329 = vadd.f32 %v1180, %v1303
        %v1330 = vadd.f32 %v1181, %v1308
        %v1331 = vadd.f32 %v1182, %v1313
        %v1332 = vadd.f32 %v1183, %v1318
        %v1333 = vadd.f32 %v1184, %v1323
        %v1334 = vld [vmem:[%s1185 + $0x1] sm:$0xff]
        %v1335 = vld [vmem:[%s1185 + $0x11] sm:$0xff]
        %v1336 = vld [vmem:[%s1185 + $0x21] sm:$0xff]
        %v1337 = vld [vmem:[%s1185 + $0x31] sm:$0xff]
        %v1338 = vld [vmem:[%s1185 + $0x41] sm:$0xff]
        %v1339 = vld [vmem:[%s1185 + $0x51] sm:$0xff]
        %v1340 = vld [vmem:[%s1185 + $0x61] sm:$0xff]
        %v1341 = vld [vmem:[%s1185 + $0x71] sm:$0xff]
        %v1343 = vsel %vm202, %v1334, 0
        %v1346 = vsel %vm202, %v1335, 0
        %v1349 = vsel %vm202, %v1336, 0
        %v1352 = vsel %vm202, %v1337, 0
        %v1355 = vsel %vm202, %v1338, 0
        %v1358 = vsel %vm202, %v1339, 0
        %v1361 = vsel %vm202, %v1340, 0
        %v1364 = vsel %vm202, %v1341, 0
        %v1367 = vsel %vm352, %v310, 0
        %1369 = vmatprep.subr.mxu0 0.0
        %1370 = vmatpush1.msra.mxu0 0.0
        %1371 = vmatprep.subr.mxu0 0.0
        %1372 = vmatpush1.msra.mxu0 0.0
        %1373 = vmatprep.subr.mxu0 0.0
        %1374 = vmatpush1.msra.mxu0 0.0
        %1375 = vmatprep.subr.mxu0 0.0
        %1376 = vmatpush1.msra.mxu0 0.0
        %1377 = vmatprep.subr.mxu0 0.0
        %1378 = vmatpush1.msra.mxu0 0.0
        %1379 = vmatprep.subr.mxu0 0.0
        %1380 = vmatpush1.msra.mxu0 0.0
        %1381 = vmatprep.subr.mxu0 0.0
        %1382 = vmatpush1.msra.mxu0 0.0
        %1383 = vmatprep.subr.mxu0 0.0
        %1384 = vmatpush1.msra.mxu0 0.0
        %1385 = vmatprep.subr.mxu0 0.0
        %1386 = vmatpush1.msra.mxu0 0.0
        %1387 = vmatprep.subr.mxu0 0.0
        %1388 = vmatpush1.msra.mxu0 0.0
        %1389 = vmatprep.subr.mxu0 0.0
        %1390 = vmatpush1.msra.mxu0 0.0
        %1391 = vmatprep.subr.mxu0 0.0
        %1392 = vmatpush1.msra.mxu0 0.0
        %1393 = vmatprep.subr.mxu0 0.0
        %1394 = vmatpush1.msra.mxu0 0.0
        %1395 = vmatprep.subr.mxu0 0.0
        %1396 = vmatpush1.msra.mxu0 0.0
        %1397 = vmatprep.subr.mxu0 0.0
        %1398 = vmatpush1.msra.mxu0 0.0
        %1399 = vmatprep.subr.mxu0 0.0
        %1400 = vmatpush1.msra.mxu0 %v1367
        %1401 = vmatprep.subr.mxu0 0.0
        %1402 = vmatpush2.msra.mxu0 0.0
        %1403 = vmatprep.subr.mxu0 0.0
        %1404 = vmatpush2.msra.mxu0 0.0
        %1405 = vmatprep.subr.mxu0 0.0
        %1406 = vmatpush2.msra.mxu0 0.0
        %1407 = vmatprep.subr.mxu0 0.0
        %1408 = vmatpush2.msra.mxu0 0.0
        %1409 = vmatprep.subr.mxu0 0.0
        %1410 = vmatpush2.msra.mxu0 0.0
        %1411 = vmatprep.subr.mxu0 0.0
        %1412 = vmatpush2.msra.mxu0 0.0
        %1413 = vmatprep.subr.mxu0 0.0
        %1414 = vmatpush2.msra.mxu0 0.0
        %1415 = vmatprep.subr.mxu0 0.0
        %1416 = vmatpush2.msra.mxu0 0.0
        %1417 = vmatprep.subr.mxu0 0.0
        %1418 = vmatpush2.msra.mxu0 0.0
        %1419 = vmatprep.subr.mxu0 0.0
        %1420 = vmatpush2.msra.mxu0 0.0
        %1421 = vmatprep.subr.mxu0 0.0
        %1422 = vmatpush2.msra.mxu0 0.0
        %1423 = vmatprep.subr.mxu0 0.0
        %1424 = vmatpush2.msra.mxu0 0.0
        %1425 = vmatprep.subr.mxu0 0.0
        %1426 = vmatpush2.msra.mxu0 0.0
        %1427 = vmatprep.subr.mxu0 0.0
        %1428 = vmatpush2.msra.mxu0 0.0
        %1429 = vmatprep.subr.mxu0 0.0
        %1430 = vmatpush2.msra.mxu0 0.0
        %1431 = vmatprep.subr.mxu0 0.0
        %1432 = vmatpush2.msra.mxu0 0.0
        %1433 = vmatprep.mubr.f32.mxu0 0.0
        %1434 = vmatmul.mubr.f32.gmra.mxu0 %v1343
        %v1435 = vpop.f32.mrf.mxu0
        %v1436 = vadd.f32 0.0, %v1435
        %v1437 = vpop.f32.mrf.mxu0
        %1438 = vmatprep.mubr.f32.mxu0 0.0
        %1439 = vmatmul.mubr.f32.gmra.mxu0 %v1346
        %v1440 = vpop.f32.mrf.mxu0
        %v1441 = vadd.f32 0.0, %v1440
        %v1442 = vpop.f32.mrf.mxu0
        %1443 = vmatprep.mubr.f32.mxu0 0.0
        %1444 = vmatmul.mubr.f32.gmra.mxu0 %v1349
        %v1445 = vpop.f32.mrf.mxu0
        %v1446 = vadd.f32 0.0, %v1445
        %v1447 = vpop.f32.mrf.mxu0
        %1448 = vmatprep.mubr.f32.mxu0 0.0
        %1449 = vmatmul.mubr.f32.gmra.mxu0 %v1352
        %v1450 = vpop.f32.mrf.mxu0
        %v1451 = vadd.f32 0.0, %v1450
        %v1452 = vpop.f32.mrf.mxu0
        %1453 = vmatprep.mubr.f32.mxu0 0.0
        %1454 = vmatmul.mubr.f32.gmra.mxu0 %v1355
        %v1455 = vpop.f32.mrf.mxu0
        %v1456 = vadd.f32 0.0, %v1455
        %v1457 = vpop.f32.mrf.mxu0
        %1458 = vmatprep.mubr.f32.mxu0 0.0
        %1459 = vmatmul.mubr.f32.gmra.mxu0 %v1358
        %v1460 = vpop.f32.mrf.mxu0
        %v1461 = vadd.f32 0.0, %v1460
        %v1462 = vpop.f32.mrf.mxu0
        %1463 = vmatprep.mubr.f32.mxu0 0.0
        %1464 = vmatmul.mubr.f32.gmra.mxu0 %v1361
        %v1465 = vpop.f32.mrf.mxu0
        %v1466 = vadd.f32 0.0, %v1465
        %v1467 = vpop.f32.mrf.mxu0
        %1468 = vmatprep.mubr.f32.mxu0 0.0
        %1469 = vmatmul.mubr.f32.gmra.mxu0 %v1364
        %v1470 = vpop.f32.mrf.mxu0
        %v1471 = vadd.f32 0.0, %v1470
        %v1472 = vpop.f32.mrf.mxu0
        %1473 = vdwg.mxu0
        %v1474 = vadd.f32 %v1326, %v1436
        %v1475 = vadd.f32 %v1327, %v1441
        %v1476 = vadd.f32 %v1328, %v1446
        %v1477 = vadd.f32 %v1329, %v1451
        %v1478 = vadd.f32 %v1330, %v1456
        %v1479 = vadd.f32 %v1331, %v1461
        %v1480 = vadd.f32 %v1332, %v1466
        %v1481 = vadd.f32 %v1333, %v1471
        %v1482 = vld [vmem:[%s1185 + $0x2] sm:$0xff]
        %v1483 = vld [vmem:[%s1185 + $0x12] sm:$0xff]
        %v1484 = vld [vmem:[%s1185 + $0x22] sm:$0xff]
        %v1485 = vld [vmem:[%s1185 + $0x32] sm:$0xff]
        %v1486 = vld [vmem:[%s1185 + $0x42] sm:$0xff]
        %v1487 = vld [vmem:[%s1185 + $0x52] sm:$0xff]
        %v1488 = vld [vmem:[%s1185 + $0x62] sm:$0xff]
        %v1489 = vld [vmem:[%s1185 + $0x72] sm:$0xff]
        %v1491 = vsel %vm202, %v1482, 0
        %v1494 = vsel %vm202, %v1483, 0
        %v1497 = vsel %vm202, %v1484, 0
        %v1500 = vsel %vm202, %v1485, 0
        %v1503 = vsel %vm202, %v1486, 0
        %v1506 = vsel %vm202, %v1487, 0
        %v1509 = vsel %vm202, %v1488, 0
        %v1512 = vsel %vm202, %v1489, 0
        %v1515 = vsel %vm352, %v311, 0
        %1517 = vmatprep.subr.mxu0 0.0
        %1518 = vmatpush1.msra.mxu0 0.0
        %1519 = vmatprep.subr.mxu0 0.0
        %1520 = vmatpush1.msra.mxu0 0.0
        %1521 = vmatprep.subr.mxu0 0.0
        %1522 = vmatpush1.msra.mxu0 0.0
        %1523 = vmatprep.subr.mxu0 0.0
        %1524 = vmatpush1.msra.mxu0 0.0
        %1525 = vmatprep.subr.mxu0 0.0
        %1526 = vmatpush1.msra.mxu0 0.0
        %1527 = vmatprep.subr.mxu0 0.0
        %1528 = vmatpush1.msra.mxu0 0.0
        %1529 = vmatprep.subr.mxu0 0.0
        %1530 = vmatpush1.msra.mxu0 0.0
        %1531 = vmatprep.subr.mxu0 0.0
        %1532 = vmatpush1.msra.mxu0 0.0
        %1533 = vmatprep.subr.mxu0 0.0
        %1534 = vmatpush1.msra.mxu0 0.0
        %1535 = vmatprep.subr.mxu0 0.0
        %1536 = vmatpush1.msra.mxu0 0.0
        %1537 = vmatprep.subr.mxu0 0.0
        %1538 = vmatpush1.msra.mxu0 0.0
        %1539 = vmatprep.subr.mxu0 0.0
        %1540 = vmatpush1.msra.mxu0 0.0
        %1541 = vmatprep.subr.mxu0 0.0
        %1542 = vmatpush1.msra.mxu0 0.0
        %1543 = vmatprep.subr.mxu0 0.0
        %1544 = vmatpush1.msra.mxu0 0.0
        %1545 = vmatprep.subr.mxu0 0.0
        %1546 = vmatpush1.msra.mxu0 0.0
        %1547 = vmatprep.subr.mxu0 0.0
        %1548 = vmatpush1.msra.mxu0 %v1515
        %1549 = vmatprep.subr.mxu0 0.0
        %1550 = vmatpush2.msra.mxu0 0.0
        %1551 = vmatprep.subr.mxu0 0.0
        %1552 = vmatpush2.msra.mxu0 0.0
        %1553 = vmatprep.subr.mxu0 0.0
        %1554 = vmatpush2.msra.mxu0 0.0
        %1555 = vmatprep.subr.mxu0 0.0
        %1556 = vmatpush2.msra.mxu0 0.0
        %1557 = vmatprep.subr.mxu0 0.0
        %1558 = vmatpush2.msra.mxu0 0.0
        %1559 = vmatprep.subr.mxu0 0.0
        %1560 = vmatpush2.msra.mxu0 0.0
        %1561 = vmatprep.subr.mxu0 0.0
        %1562 = vmatpush2.msra.mxu0 0.0
        %1563 = vmatprep.subr.mxu0 0.0
        %1564 = vmatpush2.msra.mxu0 0.0
        %1565 = vmatprep.subr.mxu0 0.0
        %1566 = vmatpush2.msra.mxu0 0.0
        %1567 = vmatprep.subr.mxu0 0.0
        %1568 = vmatpush2.msra.mxu0 0.0
        %1569 = vmatprep.subr.mxu0 0.0
        %1570 = vmatpush2.msra.mxu0 0.0
        %1571 = vmatprep.subr.mxu0 0.0
        %1572 = vmatpush2.msra.mxu0 0.0
        %1573 = vmatprep.subr.mxu0 0.0
        %1574 = vmatpush2.msra.mxu0 0.0
        %1575 = vmatprep.subr.mxu0 0.0
        %1576 = vmatpush2.msra.mxu0 0.0
        %1577 = vmatprep.subr.mxu0 0.0
        %1578 = vmatpush2.msra.mxu0 0.0
        %1579 = vmatprep.subr.mxu0 0.0
        %1580 = vmatpush2.msra.mxu0 0.0
        %1581 = vmatprep.mubr.f32.mxu0 0.0
        %1582 = vmatmul.mubr.f32.gmra.mxu0 %v1491
        %v1583 = vpop.f32.mrf.mxu0
        %v1584 = vadd.f32 0.0, %v1583
        %v1585 = vpop.f32.mrf.mxu0
        %1586 = vmatprep.mubr.f32.mxu0 0.0
        %1587 = vmatmul.mubr.f32.gmra.mxu0 %v1494
        %v1588 = vpop.f32.mrf.mxu0
        %v1589 = vadd.f32 0.0, %v1588
        %v1590 = vpop.f32.mrf.mxu0
        %1591 = vmatprep.mubr.f32.mxu0 0.0
        %1592 = vmatmul.mubr.f32.gmra.mxu0 %v1497
        %v1593 = vpop.f32.mrf.mxu0
        %v1594 = vadd.f32 0.0, %v1593
        %v1595 = vpop.f32.mrf.mxu0
        %1596 = vmatprep.mubr.f32.mxu0 0.0
        %1597 = vmatmul.mubr.f32.gmra.mxu0 %v1500
        %v1598 = vpop.f32.mrf.mxu0
        %v1599 = vadd.f32 0.0, %v1598
        %v1600 = vpop.f32.mrf.mxu0
        %1601 = vmatprep.mubr.f32.mxu0 0.0
        %1602 = vmatmul.mubr.f32.gmra.mxu0 %v1503
        %v1603 = vpop.f32.mrf.mxu0
        %v1604 = vadd.f32 0.0, %v1603
        %v1605 = vpop.f32.mrf.mxu0
        %1606 = vmatprep.mubr.f32.mxu0 0.0
        %1607 = vmatmul.mubr.f32.gmra.mxu0 %v1506
        %v1608 = vpop.f32.mrf.mxu0
        %v1609 = vadd.f32 0.0, %v1608
        %v1610 = vpop.f32.mrf.mxu0
        %1611 = vmatprep.mubr.f32.mxu0 0.0
        %1612 = vmatmul.mubr.f32.gmra.mxu0 %v1509
        %v1613 = vpop.f32.mrf.mxu0
        %v1614 = vadd.f32 0.0, %v1613
        %v1615 = vpop.f32.mrf.mxu0
        %1616 = vmatprep.mubr.f32.mxu0 0.0
        %1617 = vmatmul.mubr.f32.gmra.mxu0 %v1512
        %v1618 = vpop.f32.mrf.mxu0
        %v1619 = vadd.f32 0.0, %v1618
        %v1620 = vpop.f32.mrf.mxu0
        %1621 = vdwg.mxu0
        %v1622 = vadd.f32 %v1474, %v1584
        %v1623 = vadd.f32 %v1475, %v1589
        %v1624 = vadd.f32 %v1476, %v1594
        %v1625 = vadd.f32 %v1477, %v1599
        %v1626 = vadd.f32 %v1478, %v1604
        %v1627 = vadd.f32 %v1479, %v1609
        %v1628 = vadd.f32 %v1480, %v1614
        %v1629 = vadd.f32 %v1481, %v1619
        %vm1630 = vcmask 64512
        %1631 = vst.msk [vmem:[%s201] sm:$0xff] %vm1630, %v1622
        %1632 = vst.msk [vmem:[%s201 + $0x8] sm:$0xff] %vm1630, %v1623
        %1633 = vst.msk [vmem:[%s201 + $0x10] sm:$0xff] %vm1630, %v1624
        %1634 = vst.msk [vmem:[%s201 + $0x18] sm:$0xff] %vm1630, %v1625
        %1635 = vst.msk [vmem:[%s201 + $0x20] sm:$0xff] %vm1630, %v1626
        %1636 = vst.msk [vmem:[%s201 + $0x28] sm:$0xff] %vm1630, %v1627
        %1637 = vst.msk [vmem:[%s201 + $0x30] sm:$0xff] %vm1630, %v1628
        %1638 = vst.msk [vmem:[%s201 + $0x38] sm:$0xff] %vm1630, %v1629
        %v1639 = vsel %vm1630, %v1622, 0.0
        %v1640 = vsel %vm1630, %v1623, 0.0
        %v1641 = vadd.f32 %v1639, %v1640
        %v1642 = vsel %vm1630, %v1624, 0.0
        %v1643 = vadd.f32 %v1641, %v1642
        %v1644 = vsel %vm1630, %v1625, 0.0
        %v1645 = vadd.f32 %v1643, %v1644
        %v1646 = vsel %vm1630, %v1626, 0.0
        %v1647 = vadd.f32 %v1645, %v1646
        %v1648 = vsel %vm1630, %v1627, 0.0
        %v1649 = vadd.f32 %v1647, %v1648
        %v1650 = vsel %vm1630, %v1628, 0.0
        %v1651 = vadd.f32 %v1649, %v1650
        %v1652 = vsel %vm1630, %v1629, 0.0
        %v1653 = vadd.f32 %v1651, %v1652
        %v1654 = vrot.slane %v1653, 4
        %v1655 = vadd.f32 %v1653, %v1654
        %v1656 = vrot.slane %v1655, 2
        %v1657 = vadd.f32 %v1655, %v1656
        %v1658 = vrot.slane %v1657, 1
        %v1659 = vadd.f32 %v1657, %v1658
        %v1660 = vmul.f32 %v1659, 0.015625
        %v1661 = vsub.f32 %v1622, %v1660
        %v1662 = vsub.f32 %v1623, %v1660
        %v1663 = vsub.f32 %v1624, %v1660
        %v1664 = vsub.f32 %v1625, %v1660
        %v1665 = vsub.f32 %v1626, %v1660
        %v1666 = vsub.f32 %v1627, %v1660
        %v1667 = vsub.f32 %v1628, %v1660
        %v1668 = vsub.f32 %v1629, %v1660
        %v1669 = vmul.f32 %v1661, %v1661
        %v1670 = vmul.f32 %v1662, %v1662
        %v1671 = vmul.f32 %v1663, %v1663
        %v1672 = vmul.f32 %v1664, %v1664
        %v1673 = vmul.f32 %v1665, %v1665
        %v1674 = vmul.f32 %v1666, %v1666
        %v1675 = vmul.f32 %v1667, %v1667
        %v1676 = vmul.f32 %v1668, %v1668
        %v1677 = vsel %vm1630, %v1669, 0.0
        %v1678 = vsel %vm1630, %v1670, 0.0
        %v1679 = vadd.f32 %v1677, %v1678
        %v1680 = vsel %vm1630, %v1671, 0.0
        %v1681 = vadd.f32 %v1679, %v1680
        %v1682 = vsel %vm1630, %v1672, 0.0
        %v1683 = vadd.f32 %v1681, %v1682
        %v1684 = vsel %vm1630, %v1673, 0.0
        %v1685 = vadd.f32 %v1683, %v1684
        %v1686 = vsel %vm1630, %v1674, 0.0
        %v1687 = vadd.f32 %v1685, %v1686
        %v1688 = vsel %vm1630, %v1675, 0.0
        %v1689 = vadd.f32 %v1687, %v1688
        %v1690 = vsel %vm1630, %v1676, 0.0
        %v1691 = vadd.f32 %v1689, %v1690
        %v1692 = vrot.slane %v1691, 4
        %v1693 = vadd.f32 %v1691, %v1692
        %v1694 = vrot.slane %v1693, 2
        %v1695 = vadd.f32 %v1693, %v1694
        %v1696 = vrot.slane %v1695, 1
        %v1697 = vadd.f32 %v1695, %v1696
        %vm1698 = vcmask 1040384
        %v1699 = vsel %vm1698, %v1659, %v1697
        %vm1700 = vcmask 58368
        %1701 = vst.msk [vmem:[%s196] sm:$0x3] %vm1700, %v1699
        %p1702 = scmp.lt.s32.totalorder %s21, 1
        %s1703 = scalar_select %p1702, %s21, 1
        %s1704 = smul.addr %s1703, 8
        %s1705 = smul.addr %s1704, 8
        %s1706 = scalar_lea.vmem %s2, %s1705
        %s1707 = sand.u32 %s102, 1
        %s1708 = scalar_lea.sflag [#allocation5], %s1707
        %s1709 = sand.u32 %s102, 1
        %s1710 = smul.addr %s1709, 2
        %s1711 = scalar_lea.vmem [#allocation6], %s1710
        // Predicated region
        $region33: #{tpu_custom_call.1} parent=27 // pred_check
          %p1712 = pneg %p86
        $region34: #{tpu_custom_call.1} parent=27 // pred_check_branch
          %1714 = sbr.rel (%p1712) target = $region36
        $region35: #{tpu_custom_call.1} parent=27 // pred_region
          _
        $region36: #{tpu_custom_call.1} parent=27 // pred_fallthru
          _
        // Predicated region
        $region37: #{tpu_custom_call.1} parent=27 // pred_check
          %p1715 = pneg %p112
        $region38: #{tpu_custom_call.1} parent=27 // pred_check_branch
          %1717 = sbr.rel (%p1715) target = $region40
        $region39: #{tpu_custom_call.1} parent=27 // pred_region
          %s1719 = ssub.s32 32, 32
          %1720 = vsyncadd %s1708, %s1719
          %s1721 = smul.addr %s21, 32
          %s1722 = scalar_lea.hbm %s3, %s1721
          %s1724 = sshll.u32 %s1711, 4
          %s1725 = int_to_ptr.vmem [resolvable:$true] %s1724
          %1727 = dma.vmem_to_hbm [thread:$0]  %s1725, 32, %s1722, %s1708
        $region40: #{tpu_custom_call.1} parent=27 // pred_fallthru
          _
      $region28: #{tpu_custom_call.1} parent=5 // pred_fallthru
        _
      %p1728 = scmp.le.s32.totalorder 2, %s16
      // Predicated region
      $region41: #{tpu_custom_call.1} parent=5 // pred_check
        %p1729 = pneg %p1728
      $region42: #{tpu_custom_call.1} parent=5 // pred_check_branch
        %1731 = sbr.rel (%p1729) target = $region44
      $region43: #{tpu_custom_call.1} parent=5 // pred_region
        %s1732 = ssub.s32 %s16, 2
        // Predicated region
        $region45: #{tpu_custom_call.1} parent=43 // pred_check
          %p1733 = pneg %p92
        $region46: #{tpu_custom_call.1} parent=43 // pred_check_branch
          %1735 = sbr.rel (%p1733) target = $region48
        $region47: #{tpu_custom_call.1} parent=43 // pred_region
          %p1736 = scmp.lt.s32.totalorder %s22, 1
          %s1737 = scalar_select %p1736, %s22, 1
          %s1738 = smul.addr %s1737, 8
          %s1739 = smul.addr %s1738, 8
          %s1740 = scalar_lea.vmem %s2, %s1739
        $region48: #{tpu_custom_call.1} parent=43 // pred_fallthru
          _
        // Predicated region
        $region49: #{tpu_custom_call.1} parent=43 // pred_check
          %p1741 = pneg %p118
        $region50: #{tpu_custom_call.1} parent=43 // pred_check_branch
          %1743 = sbr.rel (%p1741) target = $region52
        $region51: #{tpu_custom_call.1} parent=43 // pred_region
          %s1744 = sand.u32 %s103, 1
          %s1745 = scalar_lea.sflag [#allocation5], %s1744
          %s1746 = sand.u32 %s103, 1
          %s1747 = smul.addr %s1746, 2
          %s1748 = scalar_lea.vmem [#allocation6], %s1747
          %1749 = dma.done %s1745, 32
        $region52: #{tpu_custom_call.1} parent=43 // pred_fallthru
          _
      $region44: #{tpu_custom_call.1} parent=5 // pred_fallthru
        _
    $region6: #{tpu_custom_call.1} parent=1 // loop_footer
      %s20 = sadd.s32 1, %s16
    $region7: #{tpu_custom_call.1} parent=1 // loop_footer_branch
      %15 = sbr.rel target = $region3
    $region8: #{tpu_custom_call.1} parent=1 // loop_exit
      _
    %1750 = vsyncpa [#allocation4], 1
    %s1751 = scalar_lea.sflag [#allocation4], 1
    %1752 = vsyncpa %s1751, 1
    %1753 = vsyncpa [#allocation5], 1
    %s1754 = scalar_lea.sflag [#allocation5], 1
    %1755 = vsyncpa %s1754, 1

</llo_original>
